<compile_context>
chip_gen: v7x
topology: tpu7x:2x2x1
jax: 0.10.0
libtpu: 0.0.40
codegen_flags: <defaults>
</compile_context>

<pallas_src>
import jax
import jax.numpy as jnp
from jax import lax
from jax.experimental import pallas as pl
from jax.experimental.pallas import tpu as pltpu


# -----------------------------------------------------------------------------
# Fused kernel: one grid step == one batch element.
# -----------------------------------------------------------------------------
def _local_attention_kernel(x_ref, wqk_ref, wv_ref, bv_ref, wt_ref, bt_ref,
                            o_ref):
    x = x_ref[0]                                                      # (N, C) f32

    # Tied q/k projection (bias-free): q == k == x @ Wqk  -> (N, Cq)
    q = jnp.dot(x, wqk_ref[...], preferred_element_type=jnp.float32)

    # Value projection: (N, C)
    v = jnp.dot(x, wv_ref[...], preferred_element_type=jnp.float32) + bv_ref[...]

    # energy[i, j] = q_i . q_j   (k == q)  -> symmetric (N, N), MXU "NT" matmul
    energy = lax.dot_general(q, q, (((1,), (1,)), ((), ())),
                             preferred_element_type=jnp.float32)

    # Row-softmax (over keys) + extra row re-normalisation of the reference:
    #   attn[m, n] = exp(energy[m, n] - M[m]) / (s[m] * (1e-9 + rowsum[m]))
    # Because energy is symmetric, attn^T[n, m] = exp(energy[n, m] - M[m]) * scale[m]
    # with M / s / scale computed along axis 0 -> no (N, N) transpose needed.
    m_row = jnp.max(energy, axis=0, keepdims=True)                    # (1, N)
    g = jnp.exp(energy - m_row)                                       # one (N, N) exp
    s_row = jnp.sum(g, axis=0, keepdims=True)                         # (1, N) softmax denom
    inv_s = 1.0 / s_row
    scale = inv_s / (1e-9 + s_row * inv_s)                            # fused denom + renorm
    attn_t = g * scale                                                # (N, N) single VPU mul

    # x_r (channels-last): x_r[n, c] = sum_m attn[m, n] * v[m, c] = (attn^T @ v)[n, c]
    x_r = jnp.dot(attn_t, v, preferred_element_type=jnp.float32)      # (N, C)

    # trans_conv with BatchNorm pre-folded into (wt, bt), then ReLU + residual
    t = jnp.dot(x - x_r, wt_ref[...], preferred_element_type=jnp.float32) + bt_ref[...]
    o_ref[0] = (x + jnp.maximum(t, 0.0)).astype(o_ref.dtype)


def local_attention_forward(x_ncw, params):
    """x_ncw: (B, C, N) float32, same layout as the PyTorch module."""
    B, C, N = x_ncw.shape
    Cq = params['w_qk'].shape[1]

    x_cl = jnp.transpose(x_ncw, (0, 2, 1)).astype(jnp.float32)        # (B, N, C)

    # Fold eval-mode BatchNorm into trans_conv (one-time, outside the kernel):
    #   (t @ Wt + bt) * sc + sh == t @ (Wt * sc) + (bt * sc + sh)
    sc = params['bn_scale'].astype(jnp.float32)
    sh = params['bn_shift'].astype(jnp.float32)
    w_t = params['w_t'].astype(jnp.float32) * sc[None, :]
    b_t = params['b_t'].astype(jnp.float32) * sc + sh

    row = lambda a: jnp.asarray(a, jnp.float32).reshape(1, -1)
    full2 = lambda b: (0, 0)

    out_cl = pl.pallas_call(
        _local_attention_kernel,
        out_shape=jax.ShapeDtypeStruct((B, N, C), jnp.float32),
        grid_spec=pltpu.PrefetchScalarGridSpec(
            num_scalar_prefetch=0,
            grid=(B,),
            in_specs=[
                pl.BlockSpec((1, N, C), lambda b: (b, 0, 0)),          # x (per batch)
                pl.BlockSpec((C, Cq), full2),                          # shared q/k weight
                pl.BlockSpec((C, C), full2),                           # v weight
                pl.BlockSpec((1, C), full2),                           # v bias
                pl.BlockSpec((C, C), full2),                           # trans weight (BN folded)
                pl.BlockSpec((1, C), full2),                           # trans bias   (BN folded)
            ],
            out_specs=pl.BlockSpec((1, N, C), lambda b: (b, 0, 0)),
        ),
        compiler_params=pltpu.CompilerParams(
            dimension_semantics=("parallel",),                         # megacore over batch
        ),
    )(x_cl,
      params['w_qk'].astype(jnp.float32),
      params['w_v'].astype(jnp.float32),
      row(params['b_v']),
      w_t, row(b_t))

    return jnp.transpose(out_cl, (0, 2, 1))                           # back to (B, C, N)


# -----------------------------------------------------------------------------
# Deterministic synthetic parameters (conv weights stored channels-last:
# y_cl = x_cl @ W  <=>  Conv1d with torch weight W_t[co, ci, 0] == W[ci, co]).
# BatchNorm folded in eval mode with synthetic running stats.
# -----------------------------------------------------------------------------
def _bn_fold(gamma, beta, mean, var, eps=1e-5):
    scale = gamma / jnp.sqrt(var + eps)
    shift = beta - mean * scale
    return scale, shift


def init_params(key, channels, r):
    cq = channels // r
    ks = jax.random.split(key, 9)
    nrm = lambda k, shape, s=0.1: s * jax.random.normal(k, shape, jnp.float32)

    gamma = 1.0 + 0.1 * jax.random.normal(ks[5], (channels,), jnp.float32)
    beta = 0.1 * jax.random.normal(ks[6], (channels,), jnp.float32)
    mean = 0.1 * jax.random.normal(ks[7], (channels,), jnp.float32)
    var = jax.random.uniform(ks[8], (channels,), jnp.float32, 0.5, 1.5)
    scale, shift = _bn_fold(gamma, beta, mean, var)

    return {
        'w_qk': nrm(ks[0], (channels, cq)),          # shared by q_conv / k_conv
        'w_v':  nrm(ks[1], (channels, channels)),
        'b_v':  nrm(ks[2], (channels,)),
        'w_t':  nrm(ks[3], (channels, channels)),
        'b_t':  nrm(ks[4], (channels,)),
        'bn_scale': scale,
        'bn_shift': shift,
    }
    # TODO(synk): training-mode BatchNorm1d (batch statistics over B*N) not
    # implemented; this uses eval-mode folded running stats.


# -----------------------------------------------------------------------------
# Pure-JAX reference (same math, XLA ops) for a correctness check.
# -----------------------------------------------------------------------------
def _reference_forward(x, p):
    hp = dict(precision=lax.Precision.HIGHEST)
    x_q = jnp.einsum('bcn,cq->bqn', x, p['w_qk'], **hp)               # (B, Cq, N)
    x_k = x_q                                                         # tied weight, no bias
    x_qp = jnp.transpose(x_q, (0, 2, 1))                              # (B, N, Cq)
    x_v = jnp.einsum('bcn,cd->bdn', x, p['w_v'], **hp) + p['b_v'].reshape(1, -1, 1)
    energy = jnp.einsum('bnq,bqm->bnm', x_qp, x_k, **hp)              # (B, N, N)
    attention = jax.nn.softmax(energy, axis=-1)
    attention = attention / (1e-9 + jnp.sum(attention, axis=2, keepdims=True))
    x_r = jnp.einsum('bcm,bmn->bcn', x_v, attention, **hp)            # (B, C, N)
    t = jnp.einsum('bcn,cd->bdn', x - x_r, p['w_t'], **hp) + p['b_t'].reshape(1, -1, 1)
    y = jnp.maximum(t * p['bn_scale'].reshape(1, -1, 1)
                    + p['bn_shift'].reshape(1, -1, 1), 0.0)
    return x + y


if __name__ == "__main__":
    B, C, N, r = 2, 128, 128, 4                                       # Cq = 32

    key = jax.random.PRNGKey(0)
    k_in, k_par = jax.random.split(key)
    x = jax.random.normal(k_in, (B, C, N), jnp.float32)               # (B, C, N) NCW
    params = init_params(k_par, C, r)

    out = jax.block_until_ready(local_attention_forward(x, params))
    assert out.shape == (B, C, N)
    assert bool(jnp.all(jnp.isfinite(out)))

    ref = jax.block_until_ready(_reference_forward(x, params))
    max_err = float(jnp.max(jnp.abs(out - ref)))
    assert bool(jnp.allclose(out, ref, atol=5e-3, rtol=5e-3)), max_err

    print("KERNEL_OK")
</pallas_src>

<mosaic_0001>
module attributes {stable_mosaic.version = 11 : i64} {
  func.func @_local_attention_kernel(%arg0: i32, %arg1: memref<1x128x128xf32, #tpu.memory_space<vmem>>, %arg2: memref<128x32xf32, #tpu.memory_space<vmem>>, %arg3: memref<128x128xf32, #tpu.memory_space<vmem>>, %arg4: memref<1x128xf32, #tpu.memory_space<vmem>>, %arg5: memref<128x128xf32, #tpu.memory_space<vmem>>, %arg6: memref<1x128xf32, #tpu.memory_space<vmem>>, %arg7: memref<1x128x128xf32, #tpu.memory_space<vmem>>) attributes {dimension_semantics = [#tpu.dimension_semantics<parallel>], iteration_bounds = array<i64: 2>, scalar_prefetch = 0 : i64, scratch_operands = 0 : i64, tpu.core_type = #tpu.core_type<tc>, window_params = [{transform_indices = @transform_0, window_bounds = array<i64: 1, 128, 128>}, {pipeline_mode = #tpu.pipeline_mode<synchronous>, transform_indices = @transform_1, window_bounds = array<i64: 128, 32>}, {pipeline_mode = #tpu.pipeline_mode<synchronous>, transform_indices = @transform_2, window_bounds = array<i64: 128, 128>}, {pipeline_mode = #tpu.pipeline_mode<synchronous>, transform_indices = @transform_3, window_bounds = array<i64: 1, 128>}, {pipeline_mode = #tpu.pipeline_mode<synchronous>, transform_indices = @transform_4, window_bounds = array<i64: 128, 128>}, {pipeline_mode = #tpu.pipeline_mode<synchronous>, transform_indices = @transform_5, window_bounds = array<i64: 1, 128>}, {transform_indices = @transform_6, window_bounds = array<i64: 1, 128, 128>}]} {
    %c0 = arith.constant 0 : index
    %c0_0 = arith.constant 0 : index
    %c0_1 = arith.constant 0 : index
    %0 = vector.load %arg1[%c0, %c0_0, %c0_1] : memref<1x128x128xf32, #tpu.memory_space<vmem>>, vector<1x128x128xf32>
    %1 = vector.shape_cast %0 : vector<1x128x128xf32> to vector<128x128xf32>
    %c0_2 = arith.constant 0 : index
    %c0_3 = arith.constant 0 : index
    %2 = vector.load %arg2[%c0_2, %c0_3] : memref<128x32xf32, #tpu.memory_space<vmem>>, vector<128x32xf32>
    %cst = arith.constant dense<0.000000e+00> : vector<128x32xf32>
    %3 = tpu.matmul %1, %2, %cst {dimension_numbers = #tpu.dot_dimension_numbers<[1], [0], [0], [1], [0, 0, 1, 1], [], []>} : vector<128x128xf32>, vector<128x32xf32>, vector<128x32xf32> -> vector<128x32xf32>
    %c0_4 = arith.constant 0 : index
    %c0_5 = arith.constant 0 : index
    %4 = vector.load %arg3[%c0_4, %c0_5] : memref<128x128xf32, #tpu.memory_space<vmem>>, vector<128x128xf32>
    %cst_6 = arith.constant dense<0.000000e+00> : vector<128x128xf32>
    %5 = tpu.matmul %1, %4, %cst_6 {dimension_numbers = #tpu.dot_dimension_numbers<[1], [0], [0], [1], [0, 0, 1, 1], [], []>} : vector<128x128xf32>, vector<128x128xf32>, vector<128x128xf32> -> vector<128x128xf32>
    %c0_7 = arith.constant 0 : index
    %c0_8 = arith.constant 0 : index
    %6 = vector.load %arg4[%c0_7, %c0_8] : memref<1x128xf32, #tpu.memory_space<vmem>>, vector<1x128xf32>
    %7 = vector.broadcast %6 : vector<1x128xf32> to vector<128x128xf32>
    %8 = arith.addf %5, %7 : vector<128x128xf32>
    %cst_9 = arith.constant dense<0.000000e+00> : vector<128x128xf32>
    %9 = tpu.matmul %3, %3, %cst_9 {dimension_numbers = #tpu.dot_dimension_numbers<[1], [1], [0], [0], [0, 0, 1, 0], [], []>} : vector<128x32xf32>, vector<128x32xf32>, vector<128x128xf32> -> vector<128x128xf32>
    %cst_10 = arith.constant dense<0xFF800000> : vector<128xf32>
    %10 = vector.multi_reduction <maximumf>, %9, %cst_10 [0] : vector<128x128xf32> to vector<128xf32>
    %11 = vector.shape_cast %10 : vector<128xf32> to vector<1x128xf32>
    %12 = vector.broadcast %11 : vector<1x128xf32> to vector<128x128xf32>
    %13 = arith.subf %9, %12 : vector<128x128xf32>
    %14 = math.exp %13 : vector<128x128xf32>
    %cst_11 = arith.constant dense<0.000000e+00> : vector<128xf32>
    %15 = vector.multi_reduction <add>, %14, %cst_11 [0] : vector<128x128xf32> to vector<128xf32>
    %16 = vector.shape_cast %15 : vector<128xf32> to vector<1x128xf32>
    %cst_12 = arith.constant 1.000000e+00 : f32
    %17 = vector.broadcast %cst_12 : f32 to vector<1x128xf32>
    %18 = arith.divf %17, %16 : vector<1x128xf32>
    %19 = arith.mulf %16, %18 : vector<1x128xf32>
    %cst_13 = arith.constant 9.99999971E-10 : f32
    %20 = vector.broadcast %cst_13 : f32 to vector<1x128xf32>
    %21 = arith.addf %20, %19 : vector<1x128xf32>
    %22 = arith.divf %18, %21 : vector<1x128xf32>
    %23 = vector.broadcast %22 : vector<1x128xf32> to vector<128x128xf32>
    %24 = arith.mulf %14, %23 : vector<128x128xf32>
    %cst_14 = arith.constant dense<0.000000e+00> : vector<128x128xf32>
    %25 = tpu.matmul %24, %8, %cst_14 {dimension_numbers = #tpu.dot_dimension_numbers<[1], [0], [0], [1], [0, 0, 1, 1], [], []>} : vector<128x128xf32>, vector<128x128xf32>, vector<128x128xf32> -> vector<128x128xf32>
    %26 = arith.subf %1, %25 : vector<128x128xf32>
    %c0_15 = arith.constant 0 : index
    %c0_16 = arith.constant 0 : index
    %27 = vector.load %arg5[%c0_15, %c0_16] : memref<128x128xf32, #tpu.memory_space<vmem>>, vector<128x128xf32>
    %cst_17 = arith.constant dense<0.000000e+00> : vector<128x128xf32>
    %28 = tpu.matmul %26, %27, %cst_17 {dimension_numbers = #tpu.dot_dimension_numbers<[1], [0], [0], [1], [0, 0, 1, 1], [], []>} : vector<128x128xf32>, vector<128x128xf32>, vector<128x128xf32> -> vector<128x128xf32>
    %c0_18 = arith.constant 0 : index
    %c0_19 = arith.constant 0 : index
    %29 = vector.load %arg6[%c0_18, %c0_19] : memref<1x128xf32, #tpu.memory_space<vmem>>, vector<1x128xf32>
    %30 = vector.broadcast %29 : vector<1x128xf32> to vector<128x128xf32>
    %31 = arith.addf %28, %30 : vector<128x128xf32>
    %cst_20 = arith.constant 0.000000e+00 : f32
    %32 = vector.broadcast %cst_20 : f32 to vector<128x128xf32>
    %33 = arith.maximumf %31, %32 : vector<128x128xf32>
    %34 = arith.addf %1, %33 : vector<128x128xf32>
    %c0_21 = arith.constant 0 : index
    %c0_22 = arith.constant 0 : index
    %c0_23 = arith.constant 0 : index
    %35 = vector.load %arg7[%c0_21, %c0_22, %c0_23] : memref<1x128x128xf32, #tpu.memory_space<vmem>>, vector<1x128x128xf32>
    %36 = vector.shape_cast %35 : vector<1x128x128xf32> to vector<128x128xf32>
    %37 = vector.shape_cast %34 : vector<128x128xf32> to vector<1x128x128xf32>
    tpu.vector_store %arg7[%c0_21, %c0_22, %c0_23], %37 {strides = array<i32>} : memref<1x128x128xf32, #tpu.memory_space<vmem>>, vector<1x128x128xf32>,
    return
  }
  func.func @transform_0(%arg0: i32) -> (i32, i32, i32) {
    %c0_i32 = arith.constant 0 : i32
    %c0_i32_0 = arith.constant 0 : i32
    %c0_i32_1 = arith.constant 0 : i32
    return %arg0, %c0_i32, %c0_i32_0 : i32, i32, i32
  }
  func.func @transform_1(%arg0: i32) -> (i32, i32) {
    %c0_i32 = arith.constant 0 : i32
    %c0_i32_0 = arith.constant 0 : i32
    %c0_i32_1 = arith.constant 0 : i32
    return %c0_i32, %c0_i32_0 : i32, i32
  }
  func.func @transform_2(%arg0: i32) -> (i32, i32) {
    %c0_i32 = arith.constant 0 : i32
    %c0_i32_0 = arith.constant 0 : i32
    %c0_i32_1 = arith.constant 0 : i32
    return %c0_i32, %c0_i32_0 : i32, i32
  }
  func.func @transform_3(%arg0: i32) -> (i32, i32) {
    %c0_i32 = arith.constant 0 : i32
    %c0_i32_0 = arith.constant 0 : i32
    %c0_i32_1 = arith.constant 0 : i32
    return %c0_i32, %c0_i32_0 : i32, i32
  }
  func.func @transform_4(%arg0: i32) -> (i32, i32) {
    %c0_i32 = arith.constant 0 : i32
    %c0_i32_0 = arith.constant 0 : i32
    %c0_i32_1 = arith.constant 0 : i32
    return %c0_i32, %c0_i32_0 : i32, i32
  }
  func.func @transform_5(%arg0: i32) -> (i32, i32) {
    %c0_i32 = arith.constant 0 : i32
    %c0_i32_0 = arith.constant 0 : i32
    %c0_i32_1 = arith.constant 0 : i32
    return %c0_i32, %c0_i32_0 : i32, i32
  }
  func.func @transform_6(%arg0: i32) -> (i32, i32, i32) {
    %c0_i32 = arith.constant 0 : i32
    %c0_i32_0 = arith.constant 0 : i32
    %c0_i32_1 = arith.constant 0 : i32
    return %arg0, %c0_i32, %c0_i32_0 : i32, i32, i32
  }
}

</mosaic_0001>

<llo_original>
// kernel: tpu_custom_call.1
$region0: #{tpu_custom_call.1}
  #allocation0 [shape = 'u32[]', space=smem, size = 0x4, offset = 0x4, fixed_abs, tag = 'smem constant byte address 0x4 - core index']
  #allocation1 [shape = 'u32[144,128]{1,0:T(1,128)}', space=vmem, size = 0x12000, scoped, tag = 'internal scratch']
  %s0 = inlined_call_operand.hbm [shape: f32[2,128,128], index: 0, kind: input, shape index: {}]
  %s1 = inlined_call_operand.vmem [shape: f32[128,32], index: 1, kind: input, shape index: {}]
  %s2 = inlined_call_operand.vmem [shape: f32[128,128], index: 2, kind: input, shape index: {}]
  %s3 = inlined_call_operand.vmem [shape: f32[1,128], index: 3, kind: input, shape index: {}]
  %s4 = inlined_call_operand.hbm [shape: f32[128,128], index: 4, kind: input, shape index: {}]
  %s5 = inlined_call_operand.vmem [shape: f32[1,128], index: 5, kind: input, shape index: {}]
  %s6 = inlined_call_operand.hbm [shape: f32[2,128,128], index: 6, kind: output, shape index: {}]
  %s7 = sld [smem:[#allocation0]]
  $region65: #{tpu_custom_call.1} parent=0
    _
  %s9 = ssub.s32 1, %s7
  %s10 = scalar_select 0, %s9, %s7
  $region1: #{tpu_custom_call.1} parent=0
    #allocation2 [shape = 'u8[131072]{0}', space=vmem, size = 0x20000, scoped, tag = 'input window, operand 0']
    #allocation3 [shape = 's32[2]{0}', space=sflag, size = 0x8, scoped, tag = 'scoped memory for tpu_custom_call.1']
    #allocation4 [shape = 's32[2]{0}', space=sflag, size = 0x8, scoped, tag = 'scoped memory for tpu_custom_call.1']
    #allocation5 [shape = 'u8[65536]{0}', space=vmem, size = 0x10000, scoped, tag = 'input window, operand 4, single buffered']
    #allocation6 [shape = 's32[1]{0}', space=sflag, size = 0x4, scoped, tag = 'scoped memory for tpu_custom_call.1']
    #allocation7 [shape = 'u8[131072]{0}', space=vmem, size = 0x20000, scoped, tag = 'output window, operand 0']
    %11 = vsyncpa [#allocation3], 0
    %s12 = scalar_lea.sflag [#allocation3], 1
    %13 = vsyncpa %s12, 0
    %14 = vsyncpa [#allocation6], 0
    %15 = vsyncpa [#allocation4], 0
    %s16 = scalar_lea.sflag [#allocation4], 1
    %17 = vsyncpa %s16, 0
    loop: start=0, step=1, limit=4
    $region2: #{tpu_custom_call.1} parent=1 // loop_pre_header
      _
    $region3: #{tpu_custom_call.1} parent=1 // loop_header
      %s19 = sphi 0, %s23
      %p20 = scmp.ge.s32.totalorder %s19, 4
      %s29 = sphi 0, %s31
      %s32 = sphi 0, %s29
      %s33 = sphi 0, %s32
      %s49 = sphi 0, %s33
      %s53 = sphi 0, %s53
      %s55 = sphi 0, %s53
      %s56 = sphi 0, %s55
      %s70 = sphi 0, %s56
      %s74 = sphi 0, %s74
      %s76 = sphi 0, %s74
      %s77 = sphi 0, %s76
      %s91 = sphi 0, %s77
      %s95 = sphi 0, %s95
      %s97 = sphi 0, %s95
      %s98 = sphi 0, %s97
      %s112 = sphi 0, %s98
      %s116 = sphi 0, %s116
      %s118 = sphi 0, %s116
      %s119 = sphi 0, %s118
      %s133 = sphi 0, %s119
      %s137 = sphi 0, %s137
      %s139 = sphi 0, %s137
      %s140 = sphi 0, %s139
      %s154 = sphi 0, %s140
      %s160 = sphi 0, %s162
      %s163 = sphi 0, %s160
      %s164 = sphi 0, %s163
      %s180 = sphi 0, %s164
    $region4: #{tpu_custom_call.1} parent=1 // loop_header_branch
      %22 = sbr.rel (%p20) target = $region8
    $region5: #{tpu_custom_call.1} parent=1 // loop_body
      %s24 = ssub.s32 %s19, 1
      %s25 = ssub.s32 %s19, 2
      %s26 = sadd.s32 %s19, 1
      %s27 = ssub.s32 %s19, %s26
      %p28 = scmp.eq.s32.totalorder %s27, 0
      %s30 = sadd.s32 %s29, 1
      %s31 = scalar_select %p28, %s29, %s30
      %p34 = pneg %p28
      %p35 = scmp.eq.s32.totalorder %s19, 1
      %p36 = por %p34, %p35
      %p37 = scmp.ne.s32.totalorder %s29, %s32
      %p38 = scmp.eq.s32.totalorder %s19, 0
      %p39 = por %p37, %p38
      %p40 = scmp.ne.s32.totalorder %s29, %s32
      %p41 = scmp.eq.s32.totalorder %s24, 1
      %p42 = por %p40, %p41
      %p43 = scmp.ne.s32.totalorder %s32, %s33
      %p44 = scmp.eq.s32.totalorder %s24, 0
      %p45 = por %p43, %p44
      %p46 = scmp.ne.s32.totalorder %s32, %s33
      %p47 = scmp.eq.s32.totalorder %s25, 1
      %p48 = por %p46, %p47
      %p50 = scmp.ne.s32.totalorder %s33, %s49
      %p51 = scmp.eq.s32.totalorder %s25, 0
      %p52 = por %p50, %p51
      %s54 = sadd.s32 %s53, 1
      %p57 = scmp.eq.s32.totalorder %s19, 1
      %p58 = scmp.ne.s32.totalorder %s53, %s55
      %p59 = scmp.eq.s32.totalorder %s19, 0
      %p60 = por %p58, %p59
      %p61 = scmp.ne.s32.totalorder %s53, %s55
      %p62 = scmp.eq.s32.totalorder %s24, 1
      %p63 = por %p61, %p62
      %p64 = scmp.ne.s32.totalorder %s55, %s56
      %p65 = scmp.eq.s32.totalorder %s24, 0
      %p66 = por %p64, %p65
      %p67 = scmp.ne.s32.totalorder %s55, %s56
      %p68 = scmp.eq.s32.totalorder %s25, 1
      %p69 = por %p67, %p68
      %p71 = scmp.ne.s32.totalorder %s56, %s70
      %p72 = scmp.eq.s32.totalorder %s25, 0
      %p73 = por %p71, %p72
      %s75 = sadd.s32 %s74, 1
      %p78 = scmp.eq.s32.totalorder %s19, 1
      %p79 = scmp.ne.s32.totalorder %s74, %s76
      %p80 = scmp.eq.s32.totalorder %s19, 0
      %p81 = por %p79, %p80
      %p82 = scmp.ne.s32.totalorder %s74, %s76
      %p83 = scmp.eq.s32.totalorder %s24, 1
      %p84 = por %p82, %p83
      %p85 = scmp.ne.s32.totalorder %s76, %s77
      %p86 = scmp.eq.s32.totalorder %s24, 0
      %p87 = por %p85, %p86
      %p88 = scmp.ne.s32.totalorder %s76, %s77
      %p89 = scmp.eq.s32.totalorder %s25, 1
      %p90 = por %p88, %p89
      %p92 = scmp.ne.s32.totalorder %s77, %s91
      %p93 = scmp.eq.s32.totalorder %s25, 0
      %p94 = por %p92, %p93
      %s96 = sadd.s32 %s95, 1
      %p99 = scmp.eq.s32.totalorder %s19, 1
      %p100 = scmp.ne.s32.totalorder %s95, %s97
      %p101 = scmp.eq.s32.totalorder %s19, 0
      %p102 = por %p100, %p101
      %p103 = scmp.ne.s32.totalorder %s95, %s97
      %p104 = scmp.eq.s32.totalorder %s24, 1
      %p105 = por %p103, %p104
      %p106 = scmp.ne.s32.totalorder %s97, %s98
      %p107 = scmp.eq.s32.totalorder %s24, 0
      %p108 = por %p106, %p107
      %p109 = scmp.ne.s32.totalorder %s97, %s98
      %p110 = scmp.eq.s32.totalorder %s25, 1
      %p111 = por %p109, %p110
      %p113 = scmp.ne.s32.totalorder %s98, %s112
      %p114 = scmp.eq.s32.totalorder %s25, 0
      %p115 = por %p113, %p114
      %s117 = sadd.s32 %s116, 1
      %p120 = scmp.eq.s32.totalorder %s19, 1
      %p121 = scmp.ne.s32.totalorder %s116, %s118
      %p122 = scmp.eq.s32.totalorder %s19, 0
      %p123 = por %p121, %p122
      %p124 = scmp.ne.s32.totalorder %s116, %s118
      %p125 = scmp.eq.s32.totalorder %s24, 1
      %p126 = por %p124, %p125
      %p127 = scmp.ne.s32.totalorder %s118, %s119
      %p128 = scmp.eq.s32.totalorder %s24, 0
      %p129 = por %p127, %p128
      %p130 = scmp.ne.s32.totalorder %s118, %s119
      %p131 = scmp.eq.s32.totalorder %s25, 1
      %p132 = por %p130, %p131
      %p134 = scmp.ne.s32.totalorder %s119, %s133
      %p135 = scmp.eq.s32.totalorder %s25, 0
      %p136 = por %p134, %p135
      %s138 = sadd.s32 %s137, 1
      %p141 = scmp.eq.s32.totalorder %s19, 1
      %p142 = scmp.ne.s32.totalorder %s137, %s139
      %p143 = scmp.eq.s32.totalorder %s19, 0
      %p144 = por %p142, %p143
      %p145 = scmp.ne.s32.totalorder %s137, %s139
      %p146 = scmp.eq.s32.totalorder %s24, 1
      %p147 = por %p145, %p146
      %p148 = scmp.ne.s32.totalorder %s139, %s140
      %p149 = scmp.eq.s32.totalorder %s24, 0
      %p150 = por %p148, %p149
      %p151 = scmp.ne.s32.totalorder %s139, %s140
      %p152 = scmp.eq.s32.totalorder %s25, 1
      %p153 = por %p151, %p152
      %p155 = scmp.ne.s32.totalorder %s140, %s154
      %p156 = scmp.eq.s32.totalorder %s25, 0
      %p157 = por %p155, %p156
      %s158 = ssub.s32 %s19, %s26
      %p159 = scmp.eq.s32.totalorder %s158, 0
      %s161 = sadd.s32 %s160, 1
      %s162 = scalar_select %p159, %s160, %s161
      %p165 = pneg %p159
      %p166 = scmp.eq.s32.totalorder %s19, 1
      %p167 = por %p165, %p166
      %p168 = scmp.ne.s32.totalorder %s160, %s163
      %p169 = scmp.eq.s32.totalorder %s19, 0
      %p170 = por %p168, %p169
      %p171 = scmp.ne.s32.totalorder %s160, %s163
      %p172 = scmp.eq.s32.totalorder %s24, 1
      %p173 = por %p171, %p172
      %p174 = scmp.ne.s32.totalorder %s163, %s164
      %p175 = scmp.eq.s32.totalorder %s24, 0
      %p176 = por %p174, %p175
      %p177 = scmp.ne.s32.totalorder %s163, %s164
      %p178 = scmp.eq.s32.totalorder %s25, 1
      %p179 = por %p177, %p178
      %p181 = scmp.ne.s32.totalorder %s164, %s180
      %p182 = scmp.eq.s32.totalorder %s25, 0
      %p183 = por %p181, %p182
      %p184 = scmp.le.s32.totalorder 1, %s19
      %p185 = scmp.lt.s32.totalorder %s19, 3
      %p186 = pnand %p184, %p185
      %p187 = pneg %p186
      // Predicated region
      $region9: #{tpu_custom_call.1} parent=5 // pred_check
        _
      $region10: #{tpu_custom_call.1} parent=5 // pred_check_branch
        %189 = sbr.rel (%p186) target = $region12
      $region11: #{tpu_custom_call.1} parent=5 // pred_region
        %s190 = ssub.s32 %s19, 1
        // Predicated region
        $region13: #{tpu_custom_call.1} parent=11 // pred_check
          %p191 = pneg %p66
        $region14: #{tpu_custom_call.1} parent=11 // pred_check_branch
          %193 = sbr.rel (%p191) target = $region16
        $region15: #{tpu_custom_call.1} parent=11 // pred_region
          _
        $region16: #{tpu_custom_call.1} parent=11 // pred_fallthru
          _
        // Predicated region
        $region17: #{tpu_custom_call.1} parent=11 // pred_check
          %p194 = pneg %p87
        $region18: #{tpu_custom_call.1} parent=11 // pred_check_branch
          %196 = sbr.rel (%p194) target = $region20
        $region19: #{tpu_custom_call.1} parent=11 // pred_region
          _
        $region20: #{tpu_custom_call.1} parent=11 // pred_fallthru
          _
        // Predicated region
        $region21: #{tpu_custom_call.1} parent=11 // pred_check
          %p197 = pneg %p108
        $region22: #{tpu_custom_call.1} parent=11 // pred_check_branch
          %199 = sbr.rel (%p197) target = $region24
        $region23: #{tpu_custom_call.1} parent=11 // pred_region
          _
        $region24: #{tpu_custom_call.1} parent=11 // pred_fallthru
          _
        // Predicated region
        $region25: #{tpu_custom_call.1} parent=11 // pred_check
          %p200 = pneg %p129
        $region26: #{tpu_custom_call.1} parent=11 // pred_check_branch
          %202 = sbr.rel (%p200) target = $region28
        $region27: #{tpu_custom_call.1} parent=11 // pred_region
          %s204 = ssub.s32 2048, 2048
          %205 = vsyncadd [#allocation6], %s204
          %s206 = sshll.u32 [#allocation5], 4
          %s207 = int_to_ptr.vmem [resolvable:$true] %s206
          %212 = dma.hbm_to_vmem [thread:$0]  %s4, 2048, %s207, [#allocation6], 128, 128, 8
        $region28: #{tpu_custom_call.1} parent=11 // pred_fallthru
          _
        // Predicated region
        $region29: #{tpu_custom_call.1} parent=11 // pred_check
          %p213 = pneg %p150
        $region30: #{tpu_custom_call.1} parent=11 // pred_check_branch
          %215 = sbr.rel (%p213) target = $region32
        $region31: #{tpu_custom_call.1} parent=11 // pred_region
          _
        $region32: #{tpu_custom_call.1} parent=11 // pred_fallthru
          _
      $region12: #{tpu_custom_call.1} parent=5 // pred_fallthru
        _
      %p216 = scmp.lt.s32.totalorder %s19, 2
      // Predicated region
      $region33: #{tpu_custom_call.1} parent=5 // pred_check
        %p217 = pneg %p216
      $region34: #{tpu_custom_call.1} parent=5 // pred_check_branch
        %219 = sbr.rel (%p217) target = $region36
      $region35: #{tpu_custom_call.1} parent=5 // pred_region
        // Predicated region
        $region37: #{tpu_custom_call.1} parent=35 // pred_check
          %p220 = pneg %p39
        $region38: #{tpu_custom_call.1} parent=35 // pred_check_branch
          %222 = sbr.rel (%p220) target = $region40
        $region39: #{tpu_custom_call.1} parent=35 // pred_region
          %s223 = sand.u32 %s29, 1
          %s224 = scalar_lea.sflag [#allocation3], %s223
          %s225 = sand.u32 %s29, 1
          %s226 = smul.addr %s225, 128
          %s227 = scalar_lea.vmem [#allocation2], %s226
          %s229 = ssub.s32 2048, 2048
          %230 = vsyncadd %s224, %s229
          %s231 = smul.addr %s19, 16
          %s232 = smul.addr %s231, 128
          %s233 = scalar_lea.hbm %s0, %s232
          %s234 = sshll.u32 %s227, 4
          %s235 = int_to_ptr.vmem [resolvable:$true] %s234
          %240 = dma.hbm_to_vmem [thread:$0]  %s233, 2048, %s235, %s224, 128, 128, 8
        $region40: #{tpu_custom_call.1} parent=35 // pred_fallthru
          _
      $region36: #{tpu_custom_call.1} parent=5 // pred_fallthru
        _
      %p241 = scmp.le.s32.totalorder 1, %s19
      %p242 = scmp.lt.s32.totalorder %s19, 3
      %p243 = pnand %p241, %p242
      %p244 = pneg %p243
      // Predicated region
      $region41: #{tpu_custom_call.1} parent=5 // pred_check
        _
      $region42: #{tpu_custom_call.1} parent=5 // pred_check_branch
        %246 = sbr.rel (%p243) target = $region44
      $region43: #{tpu_custom_call.1} parent=5 // pred_region
        %s247 = ssub.s32 %s19, 1
        %s248 = sand.u32 %s32, 1
        %s249 = scalar_lea.sflag [#allocation3], %s248
        %s250 = sand.u32 %s32, 1
        %s251 = smul.addr %s250, 128
        %s252 = scalar_lea.vmem [#allocation2], %s251
        // Predicated region
        $region45: #{tpu_custom_call.1} parent=43 // pred_check
          %p253 = pneg %p45
        $region46: #{tpu_custom_call.1} parent=43 // pred_check_branch
          %255 = sbr.rel (%p253) target = $region48
        $region47: #{tpu_custom_call.1} parent=43 // pred_region
          %256 = dma.done %s249, 2048
        $region48: #{tpu_custom_call.1} parent=43 // pred_fallthru
          _
        // Predicated region
        $region49: #{tpu_custom_call.1} parent=43 // pred_check
          %p257 = pneg %p129
        $region50: #{tpu_custom_call.1} parent=43 // pred_check_branch
          %259 = sbr.rel (%p257) target = $region52
        $region51: #{tpu_custom_call.1} parent=43 // pred_region
          %260 = dma.done [#allocation6], 2048
        $region52: #{tpu_custom_call.1} parent=43 // pred_fallthru
          _
        %s261 = sand.u32 %s32, 1
        %s262 = scalar_lea.sflag [#allocation3], %s261
        %s263 = sand.u32 %s32, 1
        %s264 = smul.addr %s263, 128
        %s265 = scalar_lea.vmem [#allocation2], %s264
        %p266 = pneg %p45
        %p267 = pneg %p42
        %p268 = pneg %p66
        %p269 = pneg %p63
        %p270 = pneg %p87
        %p271 = pneg %p84
        %p272 = pneg %p108
        %p273 = pneg %p105
        %p274 = pneg %p129
        %p275 = pneg %p126
        %p276 = pneg %p150
        %p277 = pneg %p147
        %p278 = pneg %p176
        %p279 = pneg %p173
        %s280 = sand.u32 %s163, 1
        %s281 = scalar_lea.sflag [#allocation4], %s280
        %s282 = sand.u32 %s163, 1
        %s283 = smul.addr %s282, 128
        %s284 = scalar_lea.vmem [#allocation7], %s283
        %v285 = vld [vmem:[%s252] sm:$0xff]
        %v286 = vld [vmem:[%s252 + $0x8] sm:$0xff]
        %v287 = vld [vmem:[%s252 + $0x10] sm:$0xff]
        %v288 = vld [vmem:[%s252 + $0x18] sm:$0xff]
        %v289 = vld [vmem:[%s252 + $0x20] sm:$0xff]
        %v290 = vld [vmem:[%s252 + $0x28] sm:$0xff]
        %v291 = vld [vmem:[%s252 + $0x30] sm:$0xff]
        %v292 = vld [vmem:[%s252 + $0x38] sm:$0xff]
        %v293 = vld [vmem:[%s252 + $0x40] sm:$0xff]
        %v294 = vld [vmem:[%s252 + $0x48] sm:$0xff]
        %v295 = vld [vmem:[%s252 + $0x50] sm:$0xff]
        %v296 = vld [vmem:[%s252 + $0x58] sm:$0xff]
        %v297 = vld [vmem:[%s252 + $0x60] sm:$0xff]
        %v298 = vld [vmem:[%s252 + $0x68] sm:$0xff]
        %v299 = vld [vmem:[%s252 + $0x70] sm:$0xff]
        %v300 = vld [vmem:[%s252 + $0x78] sm:$0xff]
        %v301 = vld [vmem:[%s1] sm:$0xff]
        %v302 = vld [vmem:[%s1 + $0x8] sm:$0xff]
        %v303 = vld [vmem:[%s1 + $0x10] sm:$0xff]
        %v304 = vld [vmem:[%s1 + $0x18] sm:$0xff]
        %v305 = vld [vmem:[%s1 + $0x20] sm:$0xff]
        %v306 = vld [vmem:[%s1 + $0x28] sm:$0xff]
        %v307 = vld [vmem:[%s1 + $0x30] sm:$0xff]
        %v308 = vld [vmem:[%s1 + $0x38] sm:$0xff]
        %v309 = vld [vmem:[%s1 + $0x40] sm:$0xff]
        %v310 = vld [vmem:[%s1 + $0x48] sm:$0xff]
        %v311 = vld [vmem:[%s1 + $0x50] sm:$0xff]
        %v312 = vld [vmem:[%s1 + $0x58] sm:$0xff]
        %v313 = vld [vmem:[%s1 + $0x60] sm:$0xff]
        %v314 = vld [vmem:[%s1 + $0x68] sm:$0xff]
        %v315 = vld [vmem:[%s1 + $0x70] sm:$0xff]
        %v316 = vld [vmem:[%s1 + $0x78] sm:$0xff]
        %317 = vmatprep.subr.mxu0 0.0
        %318 = vmatpush1.msra.mxu0 %v301
        %319 = vmatprep.subr.mxu0 0.0
        %320 = vmatpush1.msra.mxu0 %v302
        %321 = vmatprep.subr.mxu0 0.0
        %322 = vmatpush1.msra.mxu0 %v303
        %323 = vmatprep.subr.mxu0 0.0
        %324 = vmatpush1.msra.mxu0 %v304
        %325 = vmatprep.subr.mxu0 0.0
        %326 = vmatpush1.msra.mxu0 %v305
        %327 = vmatprep.subr.mxu0 0.0
        %328 = vmatpush1.msra.mxu0 %v306
        %329 = vmatprep.subr.mxu0 0.0
        %330 = vmatpush1.msra.mxu0 %v307
        %331 = vmatprep.subr.mxu0 0.0
        %332 = vmatpush1.msra.mxu0 %v308
        %333 = vmatprep.subr.mxu0 0.0
        %334 = vmatpush1.msra.mxu0 %v309
        %335 = vmatprep.subr.mxu0 0.0
        %336 = vmatpush1.msra.mxu0 %v310
        %337 = vmatprep.subr.mxu0 0.0
        %338 = vmatpush1.msra.mxu0 %v311
        %339 = vmatprep.subr.mxu0 0.0
        %340 = vmatpush1.msra.mxu0 %v312
        %341 = vmatprep.subr.mxu0 0.0
        %342 = vmatpush1.msra.mxu0 %v313
        %343 = vmatprep.subr.mxu0 0.0
        %344 = vmatpush1.msra.mxu0 %v314
        %345 = vmatprep.subr.mxu0 0.0
        %346 = vmatpush1.msra.mxu0 %v315
        %347 = vmatprep.subr.mxu0 0.0
        %348 = vmatpush1.msra.mxu0 %v316
        %349 = vmatprep.subr.mxu0 0.0
        %350 = vmatpush1.msra.mxu0 0.0
        %351 = vmatprep.subr.mxu0 0.0
        %352 = vmatpush1.msra.mxu0 0.0
        %353 = vmatprep.subr.mxu0 0.0
        %354 = vmatpush1.msra.mxu0 0.0
        %355 = vmatprep.subr.mxu0 0.0
        %356 = vmatpush1.msra.mxu0 0.0
        %357 = vmatprep.subr.mxu0 0.0
        %358 = vmatpush1.msra.mxu0 0.0
        %359 = vmatprep.subr.mxu0 0.0
        %360 = vmatpush1.msra.mxu0 0.0
        %361 = vmatprep.subr.mxu0 0.0
        %362 = vmatpush1.msra.mxu0 0.0
        %363 = vmatprep.subr.mxu0 0.0
        %364 = vmatpush1.msra.mxu0 0.0
        %365 = vmatprep.subr.mxu0 0.0
        %366 = vmatpush1.msra.mxu0 0.0
        %367 = vmatprep.subr.mxu0 0.0
        %368 = vmatpush1.msra.mxu0 0.0
        %369 = vmatprep.subr.mxu0 0.0
        %370 = vmatpush1.msra.mxu0 0.0
        %371 = vmatprep.subr.mxu0 0.0
        %372 = vmatpush1.msra.mxu0 0.0
        %373 = vmatprep.subr.mxu0 0.0
        %374 = vmatpush1.msra.mxu0 0.0
        %375 = vmatprep.subr.mxu0 0.0
        %376 = vmatpush1.msra.mxu0 0.0
        %377 = vmatprep.subr.mxu0 0.0
        %378 = vmatpush1.msra.mxu0 0.0
        %379 = vmatprep.subr.mxu0 0.0
        %380 = vmatpush1.msra.mxu0 0.0
        %381 = vmatprep.mubr.f32.mxu0 0.0
        %382 = vmatmul.mubr.f32.gmra.mrb[0].mxu0 %v285
        %v383 = vpop.f32.mrb[0].mxu0
        %v384 = vadd.f32 0.0, %v383
        %v385 = vpop.f32.mrb[0].mxu0
        %386 = vmatprep.mubr.f32.mxu0 0.0
        %387 = vmatmul.mubr.f32.gmra.mrb[0].mxu0 %v286
        %v388 = vpop.f32.mrb[0].mxu0
        %v389 = vadd.f32 0.0, %v388
        %v390 = vpop.f32.mrb[0].mxu0
        %391 = vmatprep.mubr.f32.mxu0 0.0
        %392 = vmatmul.mubr.f32.gmra.mrb[0].mxu0 %v287
        %v393 = vpop.f32.mrb[0].mxu0
        %v394 = vadd.f32 0.0, %v393
        %v395 = vpop.f32.mrb[0].mxu0
        %396 = vmatprep.mubr.f32.mxu0 0.0
        %397 = vmatmul.mubr.f32.gmra.mrb[0].mxu0 %v288
        %v398 = vpop.f32.mrb[0].mxu0
        %v399 = vadd.f32 0.0, %v398
        %v400 = vpop.f32.mrb[0].mxu0
        %401 = vmatprep.mubr.f32.mxu0 0.0
        %402 = vmatmul.mubr.f32.gmra.mrb[0].mxu0 %v289
        %v403 = vpop.f32.mrb[0].mxu0
        %v404 = vadd.f32 0.0, %v403
        %v405 = vpop.f32.mrb[0].mxu0
        %406 = vmatprep.mubr.f32.mxu0 0.0
        %407 = vmatmul.mubr.f32.gmra.mrb[0].mxu0 %v290
        %v408 = vpop.f32.mrb[0].mxu0
        %v409 = vadd.f32 0.0, %v408
        %v410 = vpop.f32.mrb[0].mxu0
        %411 = vmatprep.mubr.f32.mxu0 0.0
        %412 = vmatmul.mubr.f32.gmra.mrb[0].mxu0 %v291
        %v413 = vpop.f32.mrb[0].mxu0
        %v414 = vadd.f32 0.0, %v413
        %v415 = vpop.f32.mrb[0].mxu0
        %416 = vmatprep.mubr.f32.mxu0 0.0
        %417 = vmatmul.mubr.f32.gmra.mrb[0].mxu0 %v292
        %v418 = vpop.f32.mrb[0].mxu0
        %v419 = vadd.f32 0.0, %v418
        %v420 = vpop.f32.mrb[0].mxu0
        %421 = vmatprep.mubr.f32.mxu0 0.0
        %422 = vmatmul.mubr.f32.gmra.mrb[0].mxu0 %v293
        %v423 = vpop.f32.mrb[0].mxu0
        %v424 = vadd.f32 0.0, %v423
        %v425 = vpop.f32.mrb[0].mxu0
        %426 = vmatprep.mubr.f32.mxu0 0.0
        %427 = vmatmul.mubr.f32.gmra.mrb[0].mxu0 %v294
        %v428 = vpop.f32.mrb[0].mxu0
        %v429 = vadd.f32 0.0, %v428
        %v430 = vpop.f32.mrb[0].mxu0
        %431 = vmatprep.mubr.f32.mxu0 0.0
        %432 = vmatmul.mubr.f32.gmra.mrb[0].mxu0 %v295
        %v433 = vpop.f32.mrb[0].mxu0
        %v434 = vadd.f32 0.0, %v433
        %v435 = vpop.f32.mrb[0].mxu0
        %436 = vmatprep.mubr.f32.mxu0 0.0
        %437 = vmatmul.mubr.f32.gmra.mrb[0].mxu0 %v296
        %v438 = vpop.f32.mrb[0].mxu0
        %v439 = vadd.f32 0.0, %v438
        %v440 = vpop.f32.mrb[0].mxu0
        %441 = vmatprep.mubr.f32.mxu0 0.0
        %442 = vmatmul.mubr.f32.gmra.mrb[0].mxu0 %v297
        %v443 = vpop.f32.mrb[0].mxu0
        %v444 = vadd.f32 0.0, %v443
        %v445 = vpop.f32.mrb[0].mxu0
        %446 = vmatprep.mubr.f32.mxu0 0.0
        %447 = vmatmul.mubr.f32.gmra.mrb[0].mxu0 %v298
        %v448 = vpop.f32.mrb[0].mxu0
        %v449 = vadd.f32 0.0, %v448
        %v450 = vpop.f32.mrb[0].mxu0
        %451 = vmatprep.mubr.f32.mxu0 0.0
        %452 = vmatmul.mubr.f32.gmra.mrb[0].mxu0 %v299
        %v453 = vpop.f32.mrb[0].mxu0
        %v454 = vadd.f32 0.0, %v453
        %v455 = vpop.f32.mrb[0].mxu0
        %456 = vmatprep.mubr.f32.mxu0 0.0
        %457 = vmatmul.mubr.f32.gmra.mrb[0].mxu0 %v300
        %v458 = vpop.f32.mrb[0].mxu0
        %v459 = vadd.f32 0.0, %v458
        %v460 = vpop.f32.mrb[0].mxu0
        %461 = vdwg.mxu0
        %v462 = vld [vmem:[%s2] sm:$0xff]
        %v463 = vld [vmem:[%s2 + $0x8] sm:$0xff]
        %v464 = vld [vmem:[%s2 + $0x10] sm:$0xff]
        %v465 = vld [vmem:[%s2 + $0x18] sm:$0xff]
        %v466 = vld [vmem:[%s2 + $0x20] sm:$0xff]
        %v467 = vld [vmem:[%s2 + $0x28] sm:$0xff]
        %v468 = vld [vmem:[%s2 + $0x30] sm:$0xff]
        %v469 = vld [vmem:[%s2 + $0x38] sm:$0xff]
        %v470 = vld [vmem:[%s2 + $0x40] sm:$0xff]
        %v471 = vld [vmem:[%s2 + $0x48] sm:$0xff]
        %v472 = vld [vmem:[%s2 + $0x50] sm:$0xff]
        %v473 = vld [vmem:[%s2 + $0x58] sm:$0xff]
        %v474 = vld [vmem:[%s2 + $0x60] sm:$0xff]
        %v475 = vld [vmem:[%s2 + $0x68] sm:$0xff]
        %v476 = vld [vmem:[%s2 + $0x70] sm:$0xff]
        %v477 = vld [vmem:[%s2 + $0x78] sm:$0xff]
        %v478 = vld [vmem:[%s3] sm:$0x1]
        %v480 = vlaneseq
        %v481 = vshrl.u32 %v480, 7
        %v482 = vsub.s32 0, %v481
        %v483 = vrot.slane %v478, %v482
        %485 = vmatprep.subr.mxu0 0.0
        %486 = vmatpush1.msra.mxu0 %v462
        %487 = vmatprep.subr.mxu0 0.0
        %488 = vmatpush1.msra.mxu0 %v463
        %489 = vmatprep.subr.mxu0 0.0
        %490 = vmatpush1.msra.mxu0 %v464
        %491 = vmatprep.subr.mxu0 0.0
        %492 = vmatpush1.msra.mxu0 %v465
        %493 = vmatprep.subr.mxu0 0.0
        %494 = vmatpush1.msra.mxu0 %v466
        %495 = vmatprep.subr.mxu0 0.0
        %496 = vmatpush1.msra.mxu0 %v467
        %497 = vmatprep.subr.mxu0 0.0
        %498 = vmatpush1.msra.mxu0 %v468
        %499 = vmatprep.subr.mxu0 0.0
        %500 = vmatpush1.msra.mxu0 %v469
        %501 = vmatprep.subr.mxu0 0.0
        %502 = vmatpush1.msra.mxu0 %v470
        %503 = vmatprep.subr.mxu0 0.0
        %504 = vmatpush1.msra.mxu0 %v471
        %505 = vmatprep.subr.mxu0 0.0
        %506 = vmatpush1.msra.mxu0 %v472
        %507 = vmatprep.subr.mxu0 0.0
        %508 = vmatpush1.msra.mxu0 %v473
        %509 = vmatprep.subr.mxu0 0.0
        %510 = vmatpush1.msra.mxu0 %v474
        %511 = vmatprep.subr.mxu0 0.0
        %512 = vmatpush1.msra.mxu0 %v475
        %513 = vmatprep.subr.mxu0 0.0
        %514 = vmatpush1.msra.mxu0 %v476
        %515 = vmatprep.subr.mxu0 0.0
        %516 = vmatpush1.msra.mxu0 %v477
        %517 = vmatprep.subr.mxu0 0.0
        %518 = vmatpush1.msra.mxu0 0.0
        %519 = vmatprep.subr.mxu0 0.0
        %520 = vmatpush1.msra.mxu0 0.0
        %521 = vmatprep.subr.mxu0 0.0
        %522 = vmatpush1.msra.mxu0 0.0
        %523 = vmatprep.subr.mxu0 0.0
        %524 = vmatpush1.msra.mxu0 0.0
        %525 = vmatprep.subr.mxu0 0.0
        %526 = vmatpush1.msra.mxu0 0.0
        %527 = vmatprep.subr.mxu0 0.0
        %528 = vmatpush1.msra.mxu0 0.0
        %529 = vmatprep.subr.mxu0 0.0
        %530 = vmatpush1.msra.mxu0 0.0
        %531 = vmatprep.subr.mxu0 0.0
        %532 = vmatpush1.msra.mxu0 0.0
        %533 = vmatprep.subr.mxu0 0.0
        %534 = vmatpush1.msra.mxu0 0.0
        %535 = vmatprep.subr.mxu0 0.0
        %536 = vmatpush1.msra.mxu0 0.0
        %537 = vmatprep.subr.mxu0 0.0
        %538 = vmatpush1.msra.mxu0 0.0
        %539 = vmatprep.subr.mxu0 0.0
        %540 = vmatpush1.msra.mxu0 0.0
        %541 = vmatprep.subr.mxu0 0.0
        %542 = vmatpush1.msra.mxu0 0.0
        %543 = vmatprep.subr.mxu0 0.0
        %544 = vmatpush1.msra.mxu0 0.0
        %545 = vmatprep.subr.mxu0 0.0
        %546 = vmatpush1.msra.mxu0 0.0
        %547 = vmatprep.subr.mxu0 0.0
        %548 = vmatpush1.msra.mxu0 0.0
        %549 = vmatprep.mubr.f32.mxu0 0.0
        %550 = vmatmul.mubr.f32.gmra.mrb[0].mxu0 %v285
        %v551 = vpop.f32.mrb[0].mxu0
        %v552 = vadd.f32 %v483, %v551
        %v553 = vpop.f32.mrb[0].mxu0
        %554 = vmatprep.mubr.f32.mxu0 0.0
        %555 = vmatmul.mubr.f32.gmra.mrb[0].mxu0 %v286
        %v556 = vpop.f32.mrb[0].mxu0
        %v557 = vadd.f32 %v483, %v556
        %v558 = vpop.f32.mrb[0].mxu0
        %559 = vmatprep.mubr.f32.mxu0 0.0
        %560 = vmatmul.mubr.f32.gmra.mrb[0].mxu0 %v287
        %v561 = vpop.f32.mrb[0].mxu0
        %v562 = vadd.f32 %v483, %v561
        %v563 = vpop.f32.mrb[0].mxu0
        %564 = vmatprep.mubr.f32.mxu0 0.0
        %565 = vmatmul.mubr.f32.gmra.mrb[0].mxu0 %v288
        %v566 = vpop.f32.mrb[0].mxu0
        %v567 = vadd.f32 %v483, %v566
        %v568 = vpop.f32.mrb[0].mxu0
        %569 = vmatprep.mubr.f32.mxu0 0.0
        %570 = vmatmul.mubr.f32.gmra.mrb[0].mxu0 %v289
        %v571 = vpop.f32.mrb[0].mxu0
        %v572 = vadd.f32 %v483, %v571
        %v573 = vpop.f32.mrb[0].mxu0
        %574 = vmatprep.mubr.f32.mxu0 0.0
        %575 = vmatmul.mubr.f32.gmra.mrb[0].mxu0 %v290
        %v576 = vpop.f32.mrb[0].mxu0
        %v577 = vadd.f32 %v483, %v576
        %v578 = vpop.f32.mrb[0].mxu0
        %579 = vmatprep.mubr.f32.mxu0 0.0
        %580 = vmatmul.mubr.f32.gmra.mrb[0].mxu0 %v291
        %v581 = vpop.f32.mrb[0].mxu0
        %v582 = vadd.f32 %v483, %v581
        %v583 = vpop.f32.mrb[0].mxu0
        %584 = vmatprep.mubr.f32.mxu0 0.0
        %585 = vmatmul.mubr.f32.gmra.mrb[0].mxu0 %v292
        %v586 = vpop.f32.mrb[0].mxu0
        %v587 = vadd.f32 %v483, %v586
        %v588 = vpop.f32.mrb[0].mxu0
        %589 = vmatprep.mubr.f32.mxu0 0.0
        %590 = vmatmul.mubr.f32.gmra.mrb[0].mxu0 %v293
        %v591 = vpop.f32.mrb[0].mxu0
        %v592 = vadd.f32 %v483, %v591
        %v593 = vpop.f32.mrb[0].mxu0
        %594 = vmatprep.mubr.f32.mxu0 0.0
        %595 = vmatmul.mubr.f32.gmra.mrb[0].mxu0 %v294
        %v596 = vpop.f32.mrb[0].mxu0
        %v597 = vadd.f32 %v483, %v596
        %v598 = vpop.f32.mrb[0].mxu0
        %599 = vmatprep.mubr.f32.mxu0 0.0
        %600 = vmatmul.mubr.f32.gmra.mrb[0].mxu0 %v295
        %v601 = vpop.f32.mrb[0].mxu0
        %v602 = vadd.f32 %v483, %v601
        %v603 = vpop.f32.mrb[0].mxu0
        %604 = vmatprep.mubr.f32.mxu0 0.0
        %605 = vmatmul.mubr.f32.gmra.mrb[0].mxu0 %v296
        %v606 = vpop.f32.mrb[0].mxu0
        %v607 = vadd.f32 %v483, %v606
        %v608 = vpop.f32.mrb[0].mxu0
        %609 = vmatprep.mubr.f32.mxu0 0.0
        %610 = vmatmul.mubr.f32.gmra.mrb[0].mxu0 %v297
        %v611 = vpop.f32.mrb[0].mxu0
        %v612 = vadd.f32 %v483, %v611
        %v613 = vpop.f32.mrb[0].mxu0
        %614 = vmatprep.mubr.f32.mxu0 0.0
        %615 = vmatmul.mubr.f32.gmra.mrb[0].mxu0 %v298
        %v616 = vpop.f32.mrb[0].mxu0
        %v617 = vadd.f32 %v483, %v616
        %v618 = vpop.f32.mrb[0].mxu0
        %619 = vmatprep.mubr.f32.mxu0 0.0
        %620 = vmatmul.mubr.f32.gmra.mrb[0].mxu0 %v299
        %v621 = vpop.f32.mrb[0].mxu0
        %v622 = vadd.f32 %v483, %v621
        %v623 = vpop.f32.mrb[0].mxu0
        %624 = vmatprep.mubr.f32.mxu0 0.0
        %625 = vmatmul.mubr.f32.gmra.mrb[0].mxu0 %v300
        %v626 = vpop.f32.mrb[0].mxu0
        %v627 = vadd.f32 %v483, %v626
        %v628 = vpop.f32.mrb[0].mxu0
        %629 = vdwg.mxu0
        %vm630 = vcmask 261120
        %v632 = vsel %vm630, %v384, 0
        %v635 = vsel %vm630, %v389, 0
        %v638 = vsel %vm630, %v394, 0
        %v641 = vsel %vm630, %v399, 0
        %v644 = vsel %vm630, %v404, 0
        %v647 = vsel %vm630, %v409, 0
        %v650 = vsel %vm630, %v414, 0
        %v653 = vsel %vm630, %v419, 0
        %v656 = vsel %vm630, %v424, 0
        %v659 = vsel %vm630, %v429, 0
        %v662 = vsel %vm630, %v434, 0
        %v665 = vsel %vm630, %v439, 0
        %v668 = vsel %vm630, %v444, 0
        %v671 = vsel %vm630, %v449, 0
        %v674 = vsel %vm630, %v454, 0
        %v677 = vsel %vm630, %v459, 0
        %679 = vmatprep.subr.mxu0 0.0
        %680 = vmatpush1.xpose.msra.mxu0 %v632
        %681 = vmatprep.subr.mxu0 0.0
        %682 = vmatpush1.xpose.msra.mxu0 %v635
        %683 = vmatprep.subr.mxu0 0.0
        %684 = vmatpush1.xpose.msra.mxu0 %v638
        %685 = vmatprep.subr.mxu0 0.0
        %686 = vmatpush1.xpose.msra.mxu0 %v641
        %687 = vmatprep.subr.mxu0 0.0
        %688 = vmatpush1.xpose.msra.mxu0 %v644
        %689 = vmatprep.subr.mxu0 0.0
        %690 = vmatpush1.xpose.msra.mxu0 %v647
        %691 = vmatprep.subr.mxu0 0.0
        %692 = vmatpush1.xpose.msra.mxu0 %v650
        %693 = vmatprep.subr.mxu0 0.0
        %694 = vmatpush1.xpose.msra.mxu0 %v653
        %695 = vmatprep.subr.mxu0 0.0
        %696 = vmatpush1.xpose.msra.mxu0 %v656
        %697 = vmatprep.subr.mxu0 0.0
        %698 = vmatpush1.xpose.msra.mxu0 %v659
        %699 = vmatprep.subr.mxu0 0.0
        %700 = vmatpush1.xpose.msra.mxu0 %v662
        %701 = vmatprep.subr.mxu0 0.0
        %702 = vmatpush1.xpose.msra.mxu0 %v665
        %703 = vmatprep.subr.mxu0 0.0
        %704 = vmatpush1.xpose.msra.mxu0 %v668
        %705 = vmatprep.subr.mxu0 0.0
        %706 = vmatpush1.xpose.msra.mxu0 %v671
        %707 = vmatprep.subr.mxu0 0.0
        %708 = vmatpush1.xpose.msra.mxu0 %v674
        %709 = vmatprep.subr.mxu0 0.0
        %710 = vmatpush1.xpose.msra.mxu0 %v677
        %711 = vmatprep.subr.mxu0 0.0
        %712 = vmatpush1.xpose.msra.mxu0 0.0
        %713 = vmatprep.subr.mxu0 0.0
        %714 = vmatpush1.xpose.msra.mxu0 0.0
        %715 = vmatprep.subr.mxu0 0.0
        %716 = vmatpush1.xpose.msra.mxu0 0.0
        %717 = vmatprep.subr.mxu0 0.0
        %718 = vmatpush1.xpose.msra.mxu0 0.0
        %719 = vmatprep.subr.mxu0 0.0
        %720 = vmatpush1.xpose.msra.mxu0 0.0
        %721 = vmatprep.subr.mxu0 0.0
        %722 = vmatpush1.xpose.msra.mxu0 0.0
        %723 = vmatprep.subr.mxu0 0.0
        %724 = vmatpush1.xpose.msra.mxu0 0.0
        %725 = vmatprep.subr.mxu0 0.0
        %726 = vmatpush1.xpose.msra.mxu0 0.0
        %727 = vmatprep.subr.mxu0 0.0
        %728 = vmatpush1.xpose.msra.mxu0 0.0
        %729 = vmatprep.subr.mxu0 0.0
        %730 = vmatpush1.xpose.msra.mxu0 0.0
        %731 = vmatprep.subr.mxu0 0.0
        %732 = vmatpush1.xpose.msra.mxu0 0.0
        %733 = vmatprep.subr.mxu0 0.0
        %734 = vmatpush1.xpose.msra.mxu0 0.0
        %735 = vmatprep.subr.mxu0 0.0
        %736 = vmatpush1.xpose.msra.mxu0 0.0
        %737 = vmatprep.subr.mxu0 0.0
        %738 = vmatpush1.xpose.msra.mxu0 0.0
        %739 = vmatprep.subr.mxu0 0.0
        %740 = vmatpush1.xpose.msra.mxu0 0.0
        %741 = vmatprep.subr.mxu0 0.0
        %742 = vmatpush1.xpose.msra.mxu0 0.0
        %743 = vmatprep.mubr.f32.mxu0 0.0
        %744 = vmatmul.mubr.f32.gmra.mrb[0].mxu0 %v632
        %v745 = vpop.f32.mrb[0].mxu0
        %v746 = vadd.f32 0.0, %v745
        %v747 = vpop.f32.mrb[0].mxu0
        %748 = vmatprep.mubr.f32.mxu0 0.0
        %749 = vmatmul.mubr.f32.gmra.mrb[0].mxu0 %v635
        %v750 = vpop.f32.mrb[0].mxu0
        %v751 = vadd.f32 0.0, %v750
        %v752 = vpop.f32.mrb[0].mxu0
        %753 = vmatprep.mubr.f32.mxu0 0.0
        %754 = vmatmul.mubr.f32.gmra.mrb[0].mxu0 %v638
        %v755 = vpop.f32.mrb[0].mxu0
        %v756 = vadd.f32 0.0, %v755
        %v757 = vpop.f32.mrb[0].mxu0
        %758 = vmatprep.mubr.f32.mxu0 0.0
        %759 = vmatmul.mubr.f32.gmra.mrb[0].mxu0 %v641
        %v760 = vpop.f32.mrb[0].mxu0
        %v761 = vadd.f32 0.0, %v760
        %v762 = vpop.f32.mrb[0].mxu0
        %763 = vmatprep.mubr.f32.mxu0 0.0
        %764 = vmatmul.mubr.f32.gmra.mrb[0].mxu0 %v644
        %v765 = vpop.f32.mrb[0].mxu0
        %v766 = vadd.f32 0.0, %v765
        %v767 = vpop.f32.mrb[0].mxu0
        %768 = vmatprep.mubr.f32.mxu0 0.0
        %769 = vmatmul.mubr.f32.gmra.mrb[0].mxu0 %v647
        %v770 = vpop.f32.mrb[0].mxu0
        %v771 = vadd.f32 0.0, %v770
        %v772 = vpop.f32.mrb[0].mxu0
        %773 = vmatprep.mubr.f32.mxu0 0.0
        %774 = vmatmul.mubr.f32.gmra.mrb[0].mxu0 %v650
        %v775 = vpop.f32.mrb[0].mxu0
        %v776 = vadd.f32 0.0, %v775
        %v777 = vpop.f32.mrb[0].mxu0
        %778 = vmatprep.mubr.f32.mxu0 0.0
        %779 = vmatmul.mubr.f32.gmra.mrb[0].mxu0 %v653
        %v780 = vpop.f32.mrb[0].mxu0
        %v781 = vadd.f32 0.0, %v780
        %v782 = vpop.f32.mrb[0].mxu0
        %783 = vmatprep.mubr.f32.mxu0 0.0
        %784 = vmatmul.mubr.f32.gmra.mrb[0].mxu0 %v656
        %v785 = vpop.f32.mrb[0].mxu0
        %v786 = vadd.f32 0.0, %v785
        %v787 = vpop.f32.mrb[0].mxu0
        %788 = vmatprep.mubr.f32.mxu0 0.0
        %789 = vmatmul.mubr.f32.gmra.mrb[0].mxu0 %v659
        %v790 = vpop.f32.mrb[0].mxu0
        %v791 = vadd.f32 0.0, %v790
        %v792 = vpop.f32.mrb[0].mxu0
        %793 = vmatprep.mubr.f32.mxu0 0.0
        %794 = vmatmul.mubr.f32.gmra.mrb[0].mxu0 %v662
        %v795 = vpop.f32.mrb[0].mxu0
        %v796 = vadd.f32 0.0, %v795
        %v797 = vpop.f32.mrb[0].mxu0
        %798 = vmatprep.mubr.f32.mxu0 0.0
        %799 = vmatmul.mubr.f32.gmra.mrb[0].mxu0 %v665
        %v800 = vpop.f32.mrb[0].mxu0
        %v801 = vadd.f32 0.0, %v800
        %v802 = vpop.f32.mrb[0].mxu0
        %803 = vmatprep.mubr.f32.mxu0 0.0
        %804 = vmatmul.mubr.f32.gmra.mrb[0].mxu0 %v668
        %v805 = vpop.f32.mrb[0].mxu0
        %v806 = vadd.f32 0.0, %v805
        %v807 = vpop.f32.mrb[0].mxu0
        %808 = vmatprep.mubr.f32.mxu0 0.0
        %809 = vmatmul.mubr.f32.gmra.mrb[0].mxu0 %v671
        %v810 = vpop.f32.mrb[0].mxu0
        %v811 = vadd.f32 0.0, %v810
        %v812 = vpop.f32.mrb[0].mxu0
        %813 = vmatprep.mubr.f32.mxu0 0.0
        %814 = vmatmul.mubr.f32.gmra.mrb[0].mxu0 %v674
        %v815 = vpop.f32.mrb[0].mxu0
        %v816 = vadd.f32 0.0, %v815
        %v817 = vpop.f32.mrb[0].mxu0
        %818 = vmatprep.mubr.f32.mxu0 0.0
        %819 = vmatmul.mubr.f32.gmra.mrb[0].mxu0 %v677
        %v820 = vpop.f32.mrb[0].mxu0
        %v821 = vadd.f32 0.0, %v820
        %v822 = vpop.f32.mrb[0].mxu0
        %823 = vdwg.mxu0
        %v824 = vmax.f32 %v746, %v766
        %v825 = vmax.f32 %v751, %v771
        %v826 = vmax.f32 %v756, %v776
        %v827 = vmax.f32 %v761, %v781
        %v828 = vmax.f32 %v824, %v786
        %v829 = vmax.f32 %v825, %v791
        %v830 = vmax.f32 %v826, %v796
        %v831 = vmax.f32 %v827, %v801
        %v832 = vmax.f32 %v828, %v806
        %v833 = vmax.f32 %v829, %v811
        %v834 = vmax.f32 %v830, %v816
        %v835 = vmax.f32 %v831, %v821
        %v836 = vmax.f32 %v832, %v833
        %v837 = vmax.f32 %v834, %v835
        %v838 = vmax.f32 %v836, %v837
        %v839 = vrot.slane %v838, 4
        %v840 = vmax.f32 %v838, %v839
        %v841 = vrot.slane %v840, 2
        %v842 = vmax.f32 %v840, %v841
        %v843 = vrot.slane %v842, 1
        %v844 = vmax.f32 %v842, %v843
        %v845 = vsub.f32 %v746, %v844
        %v846 = vsub.f32 %v751, %v844
        %v847 = vsub.f32 %v756, %v844
        %v848 = vsub.f32 %v761, %v844
        %v849 = vsub.f32 %v766, %v844
        %v850 = vsub.f32 %v771, %v844
        %v851 = vsub.f32 %v776, %v844
        %v852 = vsub.f32 %v781, %v844
        %v853 = vsub.f32 %v786, %v844
        %v854 = vsub.f32 %v791, %v844
        %v855 = vsub.f32 %v796, %v844
        %v856 = vsub.f32 %v801, %v844
        %v857 = vsub.f32 %v806, %v844
        %v858 = vsub.f32 %v811, %v844
        %v859 = vsub.f32 %v816, %v844
        %v860 = vsub.f32 %v821, %v844
        %v861 = vmul.f32 %v845, 1.442695
        %v862 = vpow.pop %v861
        %v863 = vmul.f32 %v846, 1.442695
        %v864 = vpow.pop %v863
        %v865 = vmul.f32 %v847, 1.442695
        %v866 = vpow.pop %v865
        %v867 = vmul.f32 %v848, 1.442695
        %v868 = vpow.pop %v867
        %v869 = vmul.f32 %v849, 1.442695
        %v870 = vpow.pop %v869
        %v871 = vmul.f32 %v850, 1.442695
        %v872 = vpow.pop %v871
        %v873 = vmul.f32 %v851, 1.442695
        %v874 = vpow.pop %v873
        %v875 = vmul.f32 %v852, 1.442695
        %v876 = vpow.pop %v875
        %v877 = vmul.f32 %v853, 1.442695
        %v878 = vpow.pop %v877
        %v879 = vmul.f32 %v854, 1.442695
        %v880 = vpow.pop %v879
        %v881 = vmul.f32 %v855, 1.442695
        %v882 = vpow.pop %v881
        %v883 = vmul.f32 %v856, 1.442695
        %v884 = vpow.pop %v883
        %v885 = vmul.f32 %v857, 1.442695
        %v886 = vpow.pop %v885
        %v887 = vmul.f32 %v858, 1.442695
        %v888 = vpow.pop %v887
        %v889 = vmul.f32 %v859, 1.442695
        %v890 = vpow.pop %v889
        %v891 = vmul.f32 %v860, 1.442695
        %v892 = vpow.pop %v891
        %v893 = vadd.f32 %v862, %v864
        %v894 = vadd.f32 %v893, %v866
        %v895 = vadd.f32 %v894, %v868
        %v896 = vadd.f32 %v895, %v870
        %v897 = vadd.f32 %v896, %v872
        %v898 = vadd.f32 %v897, %v874
        %v899 = vadd.f32 %v898, %v876
        %v900 = vadd.f32 %v899, %v878
        %v901 = vadd.f32 %v900, %v880
        %v902 = vadd.f32 %v901, %v882
        %v903 = vadd.f32 %v902, %v884
        %v904 = vadd.f32 %v903, %v886
        %v905 = vadd.f32 %v904, %v888
        %v906 = vadd.f32 %v905, %v890
        %v907 = vadd.f32 %v906, %v892
        %v908 = vrot.slane %v907, 4
        %v909 = vadd.f32 %v907, %v908
        %v910 = vrot.slane %v909, 2
        %v911 = vadd.f32 %v909, %v910
        %v912 = vrot.slane %v911, 1
        %v913 = vadd.f32 %v911, %v912
        %v914 = vrcp.pop %v913
        %v915 = vmul.f32 1.0, %v914
        %v916 = vmul.f32 %v913, %v915
        %v917 = vadd.f32 %v916, 1e-09
        %v918 = vrcp.pop %v917
        %v919 = vmul.f32 %v915, %v918
        %v920 = vmul.f32 %v862, %v919
        %v921 = vmul.f32 %v864, %v919
        %v922 = vmul.f32 %v866, %v919
        %v923 = vmul.f32 %v868, %v919
        %v924 = vmul.f32 %v870, %v919
        %v925 = vmul.f32 %v872, %v919
        %v926 = vmul.f32 %v874, %v919
        %v927 = vmul.f32 %v876, %v919
        %v928 = vmul.f32 %v878, %v919
        %v929 = vmul.f32 %v880, %v919
        %v930 = vmul.f32 %v882, %v919
        %v931 = vmul.f32 %v884, %v919
        %v932 = vmul.f32 %v886, %v919
        %v933 = vmul.f32 %v888, %v919
        %v934 = vmul.f32 %v890, %v919
        %v935 = vmul.f32 %v892, %v919
        %936 = vmatprep.subr.mxu0 0.0
        %937 = vmatpush1.msra.mxu0 %v552
        %938 = vmatprep.subr.mxu0 0.0
        %939 = vmatpush1.msra.mxu0 %v557
        %940 = vmatprep.subr.mxu0 0.0
        %941 = vmatpush1.msra.mxu0 %v562
        %942 = vmatprep.subr.mxu0 0.0
        %943 = vmatpush1.msra.mxu0 %v567
        %944 = vmatprep.subr.mxu0 0.0
        %945 = vmatpush1.msra.mxu0 %v572
        %946 = vmatprep.subr.mxu0 0.0
        %947 = vmatpush1.msra.mxu0 %v577
        %948 = vmatprep.subr.mxu0 0.0
        %949 = vmatpush1.msra.mxu0 %v582
        %950 = vmatprep.subr.mxu0 0.0
        %951 = vmatpush1.msra.mxu0 %v587
        %952 = vmatprep.subr.mxu0 0.0
        %953 = vmatpush1.msra.mxu0 %v592
        %954 = vmatprep.subr.mxu0 0.0
        %955 = vmatpush1.msra.mxu0 %v597
        %956 = vmatprep.subr.mxu0 0.0
        %957 = vmatpush1.msra.mxu0 %v602
        %958 = vmatprep.subr.mxu0 0.0
        %959 = vmatpush1.msra.mxu0 %v607
        %960 = vmatprep.subr.mxu0 0.0
        %961 = vmatpush1.msra.mxu0 %v612
        %962 = vmatprep.subr.mxu0 0.0
        %963 = vmatpush1.msra.mxu0 %v617
        %964 = vmatprep.subr.mxu0 0.0
        %965 = vmatpush1.msra.mxu0 %v622
        %966 = vmatprep.subr.mxu0 0.0
        %967 = vmatpush1.msra.mxu0 %v627
        %968 = vmatprep.subr.mxu0 0.0
        %969 = vmatpush1.msra.mxu0 0.0
        %970 = vmatprep.subr.mxu0 0.0
        %971 = vmatpush1.msra.mxu0 0.0
        %972 = vmatprep.subr.mxu0 0.0
        %973 = vmatpush1.msra.mxu0 0.0
        %974 = vmatprep.subr.mxu0 0.0
        %975 = vmatpush1.msra.mxu0 0.0
        %976 = vmatprep.subr.mxu0 0.0
        %977 = vmatpush1.msra.mxu0 0.0
        %978 = vmatprep.subr.mxu0 0.0
        %979 = vmatpush1.msra.mxu0 0.0
        %980 = vmatprep.subr.mxu0 0.0
        %981 = vmatpush1.msra.mxu0 0.0
        %982 = vmatprep.subr.mxu0 0.0
        %983 = vmatpush1.msra.mxu0 0.0
        %984 = vmatprep.subr.mxu0 0.0
        %985 = vmatpush1.msra.mxu0 0.0
        %986 = vmatprep.subr.mxu0 0.0
        %987 = vmatpush1.msra.mxu0 0.0
        %988 = vmatprep.subr.mxu0 0.0
        %989 = vmatpush1.msra.mxu0 0.0
        %990 = vmatprep.subr.mxu0 0.0
        %991 = vmatpush1.msra.mxu0 0.0
        %992 = vmatprep.subr.mxu0 0.0
        %993 = vmatpush1.msra.mxu0 0.0
        %994 = vmatprep.subr.mxu0 0.0
        %995 = vmatpush1.msra.mxu0 0.0
        %996 = vmatprep.subr.mxu0 0.0
        %997 = vmatpush1.msra.mxu0 0.0
        %998 = vmatprep.subr.mxu0 0.0
        %999 = vmatpush1.msra.mxu0 0.0
        %1000 = vmatprep.mubr.f32.mxu0 0.0
        %1001 = vmatmul.mubr.f32.gmra.mrb[0].mxu0 %v920
        %v1002 = vpop.f32.mrb[0].mxu0
        %v1003 = vadd.f32 0.0, %v1002
        %v1004 = vpop.f32.mrb[0].mxu0
        %1005 = vmatprep.mubr.f32.mxu0 0.0
        %1006 = vmatmul.mubr.f32.gmra.mrb[0].mxu0 %v921
        %v1007 = vpop.f32.mrb[0].mxu0
        %v1008 = vadd.f32 0.0, %v1007
        %v1009 = vpop.f32.mrb[0].mxu0
        %1010 = vmatprep.mubr.f32.mxu0 0.0
        %1011 = vmatmul.mubr.f32.gmra.mrb[0].mxu0 %v922
        %v1012 = vpop.f32.mrb[0].mxu0
        %v1013 = vadd.f32 0.0, %v1012
        %v1014 = vpop.f32.mrb[0].mxu0
        %1015 = vmatprep.mubr.f32.mxu0 0.0
        %1016 = vmatmul.mubr.f32.gmra.mrb[0].mxu0 %v923
        %v1017 = vpop.f32.mrb[0].mxu0
        %v1018 = vadd.f32 0.0, %v1017
        %v1019 = vpop.f32.mrb[0].mxu0
        %1020 = vmatprep.mubr.f32.mxu0 0.0
        %1021 = vmatmul.mubr.f32.gmra.mrb[0].mxu0 %v924
        %v1022 = vpop.f32.mrb[0].mxu0
        %v1023 = vadd.f32 0.0, %v1022
        %v1024 = vpop.f32.mrb[0].mxu0
        %1025 = vmatprep.mubr.f32.mxu0 0.0
        %1026 = vmatmul.mubr.f32.gmra.mrb[0].mxu0 %v925
        %v1027 = vpop.f32.mrb[0].mxu0
        %v1028 = vadd.f32 0.0, %v1027
        %v1029 = vpop.f32.mrb[0].mxu0
        %1030 = vmatprep.mubr.f32.mxu0 0.0
        %1031 = vmatmul.mubr.f32.gmra.mrb[0].mxu0 %v926
        %v1032 = vpop.f32.mrb[0].mxu0
        %v1033 = vadd.f32 0.0, %v1032
        %v1034 = vpop.f32.mrb[0].mxu0
        %1035 = vmatprep.mubr.f32.mxu0 0.0
        %1036 = vmatmul.mubr.f32.gmra.mrb[0].mxu0 %v927
        %v1037 = vpop.f32.mrb[0].mxu0
        %v1038 = vadd.f32 0.0, %v1037
        %v1039 = vpop.f32.mrb[0].mxu0
        %1040 = vmatprep.mubr.f32.mxu0 0.0
        %1041 = vmatmul.mubr.f32.gmra.mrb[0].mxu0 %v928
        %v1042 = vpop.f32.mrb[0].mxu0
        %v1043 = vadd.f32 0.0, %v1042
        %v1044 = vpop.f32.mrb[0].mxu0
        %1045 = vmatprep.mubr.f32.mxu0 0.0
        %1046 = vmatmul.mubr.f32.gmra.mrb[0].mxu0 %v929
        %v1047 = vpop.f32.mrb[0].mxu0
        %v1048 = vadd.f32 0.0, %v1047
        %v1049 = vpop.f32.mrb[0].mxu0
        %1050 = vmatprep.mubr.f32.mxu0 0.0
        %1051 = vmatmul.mubr.f32.gmra.mrb[0].mxu0 %v930
        %v1052 = vpop.f32.mrb[0].mxu0
        %v1053 = vadd.f32 0.0, %v1052
        %v1054 = vpop.f32.mrb[0].mxu0
        %1055 = vmatprep.mubr.f32.mxu0 0.0
        %1056 = vmatmul.mubr.f32.gmra.mrb[0].mxu0 %v931
        %v1057 = vpop.f32.mrb[0].mxu0
        %v1058 = vadd.f32 0.0, %v1057
        %v1059 = vpop.f32.mrb[0].mxu0
        %1060 = vmatprep.mubr.f32.mxu0 0.0
        %1061 = vmatmul.mubr.f32.gmra.mrb[0].mxu0 %v932
        %v1062 = vpop.f32.mrb[0].mxu0
        %v1063 = vadd.f32 0.0, %v1062
        %v1064 = vpop.f32.mrb[0].mxu0
        %1065 = vmatprep.mubr.f32.mxu0 0.0
        %1066 = vmatmul.mubr.f32.gmra.mrb[0].mxu0 %v933
        %v1067 = vpop.f32.mrb[0].mxu0
        %v1068 = vadd.f32 0.0, %v1067
        %v1069 = vpop.f32.mrb[0].mxu0
        %1070 = vmatprep.mubr.f32.mxu0 0.0
        %1071 = vmatmul.mubr.f32.gmra.mrb[0].mxu0 %v934
        %v1072 = vpop.f32.mrb[0].mxu0
        %v1073 = vadd.f32 0.0, %v1072
        %v1074 = vpop.f32.mrb[0].mxu0
        %1075 = vmatprep.mubr.f32.mxu0 0.0
        %1076 = vmatmul.mubr.f32.gmra.mrb[0].mxu0 %v935
        %v1077 = vpop.f32.mrb[0].mxu0
        %v1078 = vadd.f32 0.0, %v1077
        %v1079 = vpop.f32.mrb[0].mxu0
        %1080 = vdwg.mxu0
        %v1081 = vsub.f32 %v285, %v1003
        %v1082 = vsub.f32 %v286, %v1008
        %v1083 = vsub.f32 %v287, %v1013
        %v1084 = vsub.f32 %v288, %v1018
        %v1085 = vsub.f32 %v289, %v1023
        %v1086 = vsub.f32 %v290, %v1028
        %v1087 = vsub.f32 %v291, %v1033
        %v1088 = vsub.f32 %v292, %v1038
        %v1089 = vsub.f32 %v293, %v1043
        %v1090 = vsub.f32 %v294, %v1048
        %v1091 = vsub.f32 %v295, %v1053
        %v1092 = vsub.f32 %v296, %v1058
        %v1093 = vsub.f32 %v297, %v1063
        %v1094 = vsub.f32 %v298, %v1068
        %v1095 = vsub.f32 %v299, %v1073
        %v1096 = vsub.f32 %v300, %v1078
        %v1097 = vld [vmem:[#allocation5] sm:$0xff]
        %v1098 = vld [vmem:[#allocation5 + $0x8] sm:$0xff]
        %v1099 = vld [vmem:[#allocation5 + $0x10] sm:$0xff]
        %v1100 = vld [vmem:[#allocation5 + $0x18] sm:$0xff]
        %v1101 = vld [vmem:[#allocation5 + $0x20] sm:$0xff]
        %v1102 = vld [vmem:[#allocation5 + $0x28] sm:$0xff]
        %v1103 = vld [vmem:[#allocation5 + $0x30] sm:$0xff]
        %v1104 = vld [vmem:[#allocation5 + $0x38] sm:$0xff]
        %v1105 = vld [vmem:[#allocation5 + $0x40] sm:$0xff]
        %v1106 = vld [vmem:[#allocation5 + $0x48] sm:$0xff]
        %v1107 = vld [vmem:[#allocation5 + $0x50] sm:$0xff]
        %v1108 = vld [vmem:[#allocation5 + $0x58] sm:$0xff]
        %v1109 = vld [vmem:[#allocation5 + $0x60] sm:$0xff]
        %v1110 = vld [vmem:[#allocation5 + $0x68] sm:$0xff]
        %v1111 = vld [vmem:[#allocation5 + $0x70] sm:$0xff]
        %v1112 = vld [vmem:[#allocation5 + $0x78] sm:$0xff]
        %v1113 = vld [vmem:[%s5] sm:$0x1]
        %v1115 = vlaneseq
        %v1116 = vshrl.u32 %v1115, 7
        %v1117 = vsub.s32 0, %v1116
        %v1118 = vrot.slane %v1113, %v1117
        %1120 = vmatprep.subr.mxu0 0.0
        %1121 = vmatpush1.msra.mxu0 %v1097
        %1122 = vmatprep.subr.mxu0 0.0
        %1123 = vmatpush1.msra.mxu0 %v1098
        %1124 = vmatprep.subr.mxu0 0.0
        %1125 = vmatpush1.msra.mxu0 %v1099
        %1126 = vmatprep.subr.mxu0 0.0
        %1127 = vmatpush1.msra.mxu0 %v1100
        %1128 = vmatprep.subr.mxu0 0.0
        %1129 = vmatpush1.msra.mxu0 %v1101
        %1130 = vmatprep.subr.mxu0 0.0
        %1131 = vmatpush1.msra.mxu0 %v1102
        %1132 = vmatprep.subr.mxu0 0.0
        %1133 = vmatpush1.msra.mxu0 %v1103
        %1134 = vmatprep.subr.mxu0 0.0
        %1135 = vmatpush1.msra.mxu0 %v1104
        %1136 = vmatprep.subr.mxu0 0.0
        %1137 = vmatpush1.msra.mxu0 %v1105
        %1138 = vmatprep.subr.mxu0 0.0
        %1139 = vmatpush1.msra.mxu0 %v1106
        %1140 = vmatprep.subr.mxu0 0.0
        %1141 = vmatpush1.msra.mxu0 %v1107
        %1142 = vmatprep.subr.mxu0 0.0
        %1143 = vmatpush1.msra.mxu0 %v1108
        %1144 = vmatprep.subr.mxu0 0.0
        %1145 = vmatpush1.msra.mxu0 %v1109
        %1146 = vmatprep.subr.mxu0 0.0
        %1147 = vmatpush1.msra.mxu0 %v1110
        %1148 = vmatprep.subr.mxu0 0.0
        %1149 = vmatpush1.msra.mxu0 %v1111
        %1150 = vmatprep.subr.mxu0 0.0
        %1151 = vmatpush1.msra.mxu0 %v1112
        %1152 = vmatprep.subr.mxu0 0.0
        %1153 = vmatpush1.msra.mxu0 0.0
        %1154 = vmatprep.subr.mxu0 0.0
        %1155 = vmatpush1.msra.mxu0 0.0
        %1156 = vmatprep.subr.mxu0 0.0
        %1157 = vmatpush1.msra.mxu0 0.0
        %1158 = vmatprep.subr.mxu0 0.0
        %1159 = vmatpush1.msra.mxu0 0.0
        %1160 = vmatprep.subr.mxu0 0.0
        %1161 = vmatpush1.msra.mxu0 0.0
        %1162 = vmatprep.subr.mxu0 0.0
        %1163 = vmatpush1.msra.mxu0 0.0
        %1164 = vmatprep.subr.mxu0 0.0
        %1165 = vmatpush1.msra.mxu0 0.0
        %1166 = vmatprep.subr.mxu0 0.0
        %1167 = vmatpush1.msra.mxu0 0.0
        %1168 = vmatprep.subr.mxu0 0.0
        %1169 = vmatpush1.msra.mxu0 0.0
        %1170 = vmatprep.subr.mxu0 0.0
        %1171 = vmatpush1.msra.mxu0 0.0
        %1172 = vmatprep.subr.mxu0 0.0
        %1173 = vmatpush1.msra.mxu0 0.0
        %1174 = vmatprep.subr.mxu0 0.0
        %1175 = vmatpush1.msra.mxu0 0.0
        %1176 = vmatprep.subr.mxu0 0.0
        %1177 = vmatpush1.msra.mxu0 0.0
        %1178 = vmatprep.subr.mxu0 0.0
        %1179 = vmatpush1.msra.mxu0 0.0
        %1180 = vmatprep.subr.mxu0 0.0
        %1181 = vmatpush1.msra.mxu0 0.0
        %1182 = vmatprep.subr.mxu0 0.0
        %1183 = vmatpush1.msra.mxu0 0.0
        %1184 = vmatprep.mubr.f32.mxu0 0.0
        %1185 = vmatmul.mubr.f32.gmra.mrb[0].mxu0 %v1081
        %v1186 = vpop.f32.mrb[0].mxu0
        %v1187 = vadd.f32 %v1118, %v1186
        %v1188 = vpop.f32.mrb[0].mxu0
        %1189 = vmatprep.mubr.f32.mxu0 0.0
        %1190 = vmatmul.mubr.f32.gmra.mrb[0].mxu0 %v1082
        %v1191 = vpop.f32.mrb[0].mxu0
        %v1192 = vadd.f32 %v1118, %v1191
        %v1193 = vpop.f32.mrb[0].mxu0
        %1194 = vmatprep.mubr.f32.mxu0 0.0
        %1195 = vmatmul.mubr.f32.gmra.mrb[0].mxu0 %v1083
        %v1196 = vpop.f32.mrb[0].mxu0
        %v1197 = vadd.f32 %v1118, %v1196
        %v1198 = vpop.f32.mrb[0].mxu0
        %1199 = vmatprep.mubr.f32.mxu0 0.0
        %1200 = vmatmul.mubr.f32.gmra.mrb[0].mxu0 %v1084
        %v1201 = vpop.f32.mrb[0].mxu0
        %v1202 = vadd.f32 %v1118, %v1201
        %v1203 = vpop.f32.mrb[0].mxu0
        %1204 = vmatprep.mubr.f32.mxu0 0.0
        %1205 = vmatmul.mubr.f32.gmra.mrb[0].mxu0 %v1085
        %v1206 = vpop.f32.mrb[0].mxu0
        %v1207 = vadd.f32 %v1118, %v1206
        %v1208 = vpop.f32.mrb[0].mxu0
        %1209 = vmatprep.mubr.f32.mxu0 0.0
        %1210 = vmatmul.mubr.f32.gmra.mrb[0].mxu0 %v1086
        %v1211 = vpop.f32.mrb[0].mxu0
        %v1212 = vadd.f32 %v1118, %v1211
        %v1213 = vpop.f32.mrb[0].mxu0
        %1214 = vmatprep.mubr.f32.mxu0 0.0
        %1215 = vmatmul.mubr.f32.gmra.mrb[0].mxu0 %v1087
        %v1216 = vpop.f32.mrb[0].mxu0
        %v1217 = vadd.f32 %v1118, %v1216
        %v1218 = vpop.f32.mrb[0].mxu0
        %1219 = vmatprep.mubr.f32.mxu0 0.0
        %1220 = vmatmul.mubr.f32.gmra.mrb[0].mxu0 %v1088
        %v1221 = vpop.f32.mrb[0].mxu0
        %v1222 = vadd.f32 %v1118, %v1221
        %v1223 = vpop.f32.mrb[0].mxu0
        %1224 = vmatprep.mubr.f32.mxu0 0.0
        %1225 = vmatmul.mubr.f32.gmra.mrb[0].mxu0 %v1089
        %v1226 = vpop.f32.mrb[0].mxu0
        %v1227 = vadd.f32 %v1118, %v1226
        %v1228 = vpop.f32.mrb[0].mxu0
        %1229 = vmatprep.mubr.f32.mxu0 0.0
        %1230 = vmatmul.mubr.f32.gmra.mrb[0].mxu0 %v1090
        %v1231 = vpop.f32.mrb[0].mxu0
        %v1232 = vadd.f32 %v1118, %v1231
        %v1233 = vpop.f32.mrb[0].mxu0
        %1234 = vmatprep.mubr.f32.mxu0 0.0
        %1235 = vmatmul.mubr.f32.gmra.mrb[0].mxu0 %v1091
        %v1236 = vpop.f32.mrb[0].mxu0
        %v1237 = vadd.f32 %v1118, %v1236
        %v1238 = vpop.f32.mrb[0].mxu0
        %1239 = vmatprep.mubr.f32.mxu0 0.0
        %1240 = vmatmul.mubr.f32.gmra.mrb[0].mxu0 %v1092
        %v1241 = vpop.f32.mrb[0].mxu0
        %v1242 = vadd.f32 %v1118, %v1241
        %v1243 = vpop.f32.mrb[0].mxu0
        %1244 = vmatprep.mubr.f32.mxu0 0.0
        %1245 = vmatmul.mubr.f32.gmra.mrb[0].mxu0 %v1093
        %v1246 = vpop.f32.mrb[0].mxu0
        %v1247 = vadd.f32 %v1118, %v1246
        %v1248 = vpop.f32.mrb[0].mxu0
        %1249 = vmatprep.mubr.f32.mxu0 0.0
        %1250 = vmatmul.mubr.f32.gmra.mrb[0].mxu0 %v1094
        %v1251 = vpop.f32.mrb[0].mxu0
        %v1252 = vadd.f32 %v1118, %v1251
        %v1253 = vpop.f32.mrb[0].mxu0
        %1254 = vmatprep.mubr.f32.mxu0 0.0
        %1255 = vmatmul.mubr.f32.gmra.mrb[0].mxu0 %v1095
        %v1256 = vpop.f32.mrb[0].mxu0
        %v1257 = vadd.f32 %v1118, %v1256
        %v1258 = vpop.f32.mrb[0].mxu0
        %1259 = vmatprep.mubr.f32.mxu0 0.0
        %1260 = vmatmul.mubr.f32.gmra.mrb[0].mxu0 %v1096
        %v1261 = vpop.f32.mrb[0].mxu0
        %v1262 = vadd.f32 %v1118, %v1261
        %v1263 = vpop.f32.mrb[0].mxu0
        %1264 = vdwg.mxu0
        %v1265 = vmax.f32 %v1187, 0.0
        %v1266 = vmax.f32 %v1192, 0.0
        %v1267 = vmax.f32 %v1197, 0.0
        %v1268 = vmax.f32 %v1202, 0.0
        %v1269 = vmax.f32 %v1207, 0.0
        %v1270 = vmax.f32 %v1212, 0.0
        %v1271 = vmax.f32 %v1217, 0.0
        %v1272 = vmax.f32 %v1222, 0.0
        %v1273 = vmax.f32 %v1227, 0.0
        %v1274 = vmax.f32 %v1232, 0.0
        %v1275 = vmax.f32 %v1237, 0.0
        %v1276 = vmax.f32 %v1242, 0.0
        %v1277 = vmax.f32 %v1247, 0.0
        %v1278 = vmax.f32 %v1252, 0.0
        %v1279 = vmax.f32 %v1257, 0.0
        %v1280 = vmax.f32 %v1262, 0.0
        %v1281 = vadd.f32 %v285, %v1265
        %v1282 = vadd.f32 %v286, %v1266
        %v1283 = vadd.f32 %v287, %v1267
        %v1284 = vadd.f32 %v288, %v1268
        %v1285 = vadd.f32 %v289, %v1269
        %v1286 = vadd.f32 %v290, %v1270
        %v1287 = vadd.f32 %v291, %v1271
        %v1288 = vadd.f32 %v292, %v1272
        %v1289 = vadd.f32 %v293, %v1273
        %v1290 = vadd.f32 %v294, %v1274
        %v1291 = vadd.f32 %v295, %v1275
        %v1292 = vadd.f32 %v296, %v1276
        %v1293 = vadd.f32 %v297, %v1277
        %v1294 = vadd.f32 %v298, %v1278
        %v1295 = vadd.f32 %v299, %v1279
        %v1296 = vadd.f32 %v300, %v1280
        %1297 = vst [vmem:[%s284] sm:$0xff] %v1281
        %1298 = vst [vmem:[%s284 + $0x8] sm:$0xff] %v1282
        %1299 = vst [vmem:[%s284 + $0x10] sm:$0xff] %v1283
        %1300 = vst [vmem:[%s284 + $0x18] sm:$0xff] %v1284
        %1301 = vst [vmem:[%s284 + $0x20] sm:$0xff] %v1285
        %1302 = vst [vmem:[%s284 + $0x28] sm:$0xff] %v1286
        %1303 = vst [vmem:[%s284 + $0x30] sm:$0xff] %v1287
        %1304 = vst [vmem:[%s284 + $0x38] sm:$0xff] %v1288
        %1305 = vst [vmem:[%s284 + $0x40] sm:$0xff] %v1289
        %1306 = vst [vmem:[%s284 + $0x48] sm:$0xff] %v1290
        %1307 = vst [vmem:[%s284 + $0x50] sm:$0xff] %v1291
        %1308 = vst [vmem:[%s284 + $0x58] sm:$0xff] %v1292
        %1309 = vst [vmem:[%s284 + $0x60] sm:$0xff] %v1293
        %1310 = vst [vmem:[%s284 + $0x68] sm:$0xff] %v1294
        %1311 = vst [vmem:[%s284 + $0x70] sm:$0xff] %v1295
        %1312 = vst [vmem:[%s284 + $0x78] sm:$0xff] %v1296
        %s1313 = sand.u32 %s163, 1
        %s1314 = scalar_lea.sflag [#allocation4], %s1313
        %s1315 = sand.u32 %s163, 1
        %s1316 = smul.addr %s1315, 128
        %s1317 = scalar_lea.vmem [#allocation7], %s1316
        // Predicated region
        $region53: #{tpu_custom_call.1} parent=43 // pred_check
          %p1318 = pneg %p173
        $region54: #{tpu_custom_call.1} parent=43 // pred_check_branch
          %1320 = sbr.rel (%p1318) target = $region56
        $region55: #{tpu_custom_call.1} parent=43 // pred_region
          %s1322 = ssub.s32 2048, 2048
          %1323 = vsyncadd %s1314, %s1322
          %s1324 = smul.addr %s24, 16
          %s1325 = smul.addr %s1324, 128
          %s1326 = scalar_lea.hbm %s6, %s1325
          %s1327 = sshll.u32 %s1317, 4
          %s1328 = int_to_ptr.vmem [resolvable:$true] %s1327
          %1333 = dma.vmem_to_hbm [thread:$0]  %s1328, 2048, %s1326, %s1314, 128, 128, 8
        $region56: #{tpu_custom_call.1} parent=43 // pred_fallthru
          _
      $region44: #{tpu_custom_call.1} parent=5 // pred_fallthru
        _
      %p1334 = scmp.le.s32.totalorder 2, %s19
      // Predicated region
      $region57: #{tpu_custom_call.1} parent=5 // pred_check
        %p1335 = pneg %p1334
      $region58: #{tpu_custom_call.1} parent=5 // pred_check_branch
        %1337 = sbr.rel (%p1335) target = $region60
      $region59: #{tpu_custom_call.1} parent=5 // pred_region
        %s1338 = ssub.s32 %s19, 2
        // Predicated region
        $region61: #{tpu_custom_call.1} parent=59 // pred_check
          %p1339 = pneg %p179
        $region62: #{tpu_custom_call.1} parent=59 // pred_check_branch
          %1341 = sbr.rel (%p1339) target = $region64
        $region63: #{tpu_custom_call.1} parent=59 // pred_region
          %s1342 = sand.u32 %s164, 1
          %s1343 = scalar_lea.sflag [#allocation4], %s1342
          %s1344 = sand.u32 %s164, 1
          %s1345 = smul.addr %s1344, 128
          %s1346 = scalar_lea.vmem [#allocation7], %s1345
          %1347 = dma.done %s1343, 2048
        $region64: #{tpu_custom_call.1} parent=59 // pred_fallthru
          _
      $region60: #{tpu_custom_call.1} parent=5 // pred_fallthru
        _
    $region6: #{tpu_custom_call.1} parent=1 // loop_footer
      %s23 = sadd.s32 1, %s19
    $region7: #{tpu_custom_call.1} parent=1 // loop_footer_branch
      %18 = sbr.rel target = $region3
    $region8: #{tpu_custom_call.1} parent=1 // loop_exit
      _
    %1348 = vsyncpa [#allocation3], 1
    %s1349 = scalar_lea.sflag [#allocation3], 1
    %1350 = vsyncpa %s1349, 1
    %1351 = vsyncpa [#allocation6], 1
    %1352 = vsyncpa [#allocation4], 1
    %s1353 = scalar_lea.sflag [#allocation4], 1
    %1354 = vsyncpa %s1353, 1

</llo_original>
